<compile_context>
chip_gen: v7x
topology: tpu7x:2x2x1
jax: 0.10.0
libtpu: 0.0.40
codegen_flags: <defaults>
</compile_context>

<pallas_src>
import functools

import jax
import jax.numpy as jnp
import numpy as np
from jax.experimental import pallas as pl
from jax.experimental.pallas import tpu as pltpu

# Toy shapes use <1 MiB of VMEM; at production sizes raise to 64-96 MiB on
# v5e/v6e (128 MiB physical) and keep <=32 MiB scoped on v7x (64 MiB physical).
_VMEM_LIMIT = 32 * 1024 * 1024
_EPS = 1e-5


def _round_up(x, m):
    return ((x + m - 1) // m) * m


# ---------- fused stage kernel: conv (matmul) + bias + GLU + SwitchNorm + residual ----
def _stage_kernel(p_ref, w_ref, bias_ref, x_ref, g_ref, bt_ref, mw_ref, vw_ref,
                  o_ref, *, C, Cp, B, HW):
    # p_ref : (KKCp, B*HW) bf16   im2col patches, batch folded onto the lane axis
    # w_ref : (2*Cp, KKCp) bf16   packed conv weight; GLU halves at sublane multiple of 8
    # bias  : (2*Cp, 1)    f32
    # x_ref : (Cp, B*HW)   f32    residual input, same layout as the conv output
    # g/bt  : (Cp, 1)      f32    SwitchNorm affine (zero on padded channels)
    # mw/vw : (3,)         f32    softmax'd IN/LN/BN mixing weights (SMEM scalars)
    # o_ref : (Cp, B*HW)   f32
    acc = jnp.dot(w_ref[...], p_ref[...], preferred_element_type=jnp.float32)
    acc = acc + bias_ref[...]                                   # (2Cp, B*HW)

    # GLU (PyTorch chunk(2, dim=1)): split at the sublane-tile boundary Cp.
    y = acc[:Cp, :] * jax.nn.sigmoid(acc[Cp:, :])               # (Cp, B*HW); padded rows == 0

    mw0, mw1, mw2 = mw_ref[0], mw_ref[1], mw_ref[2]
    vw0, vw1, vw2 = vw_ref[0], vw_ref[1], vw_ref[2]

    # Per-(b, c) instance statistics via static, 128-aligned lane slices (HW is
    # a multiple of 128 here).  B is a static Python int -> unrolled.
    means, var_ins, temps = [], [], []
    for b in range(B):
        yb = y[:, b * HW:(b + 1) * HW]
        m = jnp.mean(yb, axis=1, keepdims=True)                 # (Cp, 1)
        d = yb - m
        v = jnp.sum(d * d, axis=1, keepdims=True) * (1.0 / (HW - 1))  # unbiased (torch.var)
        means.append(m)
        var_ins.append(v)
        temps.append(v + m * m)

    # BN statistics: mean over the batch, per channel.
    mean_bn = sum(means) * (1.0 / B)                            # (Cp, 1)
    var_bn = sum(temps) * (1.0 / B) - mean_bn * mean_bn

    gamma = g_ref[...]
    beta = bt_ref[...]
    for b in range(B):
        # LN statistics: mean over the REAL channels (padded rows contribute 0 to sums).
        mean_ln = jnp.sum(means[b]) * (1.0 / C)                 # scalar
        var_ln = jnp.sum(temps[b]) * (1.0 / C) - mean_ln * mean_ln
        mean = mw0 * means[b] + mw1 * mean_ln + mw2 * mean_bn   # (Cp, 1)
        var = vw0 * var_ins[b] + vw1 * var_ln + vw2 * var_bn
        scale = gamma * jax.lax.rsqrt(var + _EPS)               # (Cp, 1)
        shift = beta - mean * scale
        sl = slice(b * HW, (b + 1) * HW)
        # residual + normalized GLU activation, lane-dense unmasked stores.
        o_ref[:, sl] = x_ref[:, sl] + y[:, sl] * scale + shift


def _run_stage(patches, w_packed, bias_packed, x_flat, gamma_p, beta_p, mw_s, vw_s,
               *, C, Cp, B, HW):
    kern = functools.partial(_stage_kernel, C=C, Cp=Cp, B=B, HW=HW)
    vmem = lambda: pl.BlockSpec(memory_space=pltpu.MemorySpace.VMEM)
    smem = lambda: pl.BlockSpec(memory_space=pltpu.MemorySpace.SMEM)
    return pl.pallas_call(
        kern,
        out_shape=jax.ShapeDtypeStruct((Cp, B * HW), jnp.float32),
        in_specs=[vmem(), vmem(), vmem(), vmem(), vmem(), vmem(), smem(), smem()],
        out_specs=vmem(),
        compiler_params=pltpu.CompilerParams(vmem_limit_bytes=_VMEM_LIMIT),
    )(patches, w_packed, bias_packed, x_flat, gamma_p, beta_p, mw_s, vw_s)


# ----------------------------- wrapper-side helpers (tiny / XLA) ----------------------
def _pack_weight(w_oihw, Cp, kkc_pad):
    """OIHW conv weight -> (2*Cp, kkc_pad) bf16.
    Contraction order is (kh, kw, c) over Cp padded input channels; the two GLU
    output halves are each padded to Cp rows so the split is sublane-tile aligned."""
    O, C, K, _ = w_oihw.shape                                   # O == 2*C
    w = jnp.transpose(w_oihw, (0, 2, 3, 1))                     # (2C, K, K, C)
    w = jnp.pad(w, ((0, 0), (0, 0), (0, 0), (0, Cp - C)))       # pad input channels -> Cp
    w = w.reshape(O, K * K * Cp)
    w = jnp.pad(w, ((0, 0), (0, kkc_pad - K * K * Cp)))         # lane-dense contraction
    zeros = jnp.zeros((Cp - C, kkc_pad), w.dtype)
    packed = jnp.concatenate([w[:C], zeros, w[C:], zeros], axis=0)   # (2*Cp, kkc_pad)
    return packed.astype(jnp.bfloat16)


def _pack_bias(b, C, Cp):
    out = jnp.zeros((2 * Cp,), jnp.float32)
    out = out.at[:C].set(b[:C]).at[Cp:Cp + C].set(b[C:])
    return out.reshape(2 * Cp, 1)


def _pack_affine(v, C, Cp):
    return jnp.pad(v.astype(jnp.float32), (0, Cp - C)).reshape(Cp, 1)


def _im2col(x_cbhw, K, D, kkc_pad):
    """Dilated im2col on channel-major activations:
    (Cp, B, H, W) -> (kkc_pad, B*H*W) bf16, row order (kh, kw, c)."""
    Cp, B, H, W = x_cbhw.shape
    pad = (K + (K - 1) * (D - 1)) // 2
    xp = jnp.pad(x_cbhw, ((0, 0), (0, 0), (pad, pad), (pad, pad)))
    taps = [xp[:, :, kh * D:kh * D + H, kw * D:kw * D + W]
            for kh in range(K) for kw in range(K)]
    p = jnp.stack(taps, axis=0).reshape(K * K * Cp, B * H * W)
    p = jnp.pad(p, ((0, kkc_pad - K * K * Cp), (0, 0)))
    return p.astype(jnp.bfloat16)


# ----------------------------------- covD forward -------------------------------------
def covd_forward(x_nchw, params, D):
    B, C, H, W = x_nchw.shape
    Cp = _round_up(C, 8)
    HW = H * W

    # One entry transpose NCHW -> channel-major (Cp, B, H, W).  Padded channels
    # are zero and stay zero through both stages (their gamma/beta are zero).
    x_cb = jnp.transpose(x_nchw.astype(jnp.float32), (1, 0, 2, 3))
    x_cb = jnp.pad(x_cb, ((0, Cp - C), (0, 0), (0, 0), (0, 0)))
    x_flat = x_cb.reshape(Cp, B * HW)

    def stage(x_cbhw, x_flat_in, w_p, b_p, g_p, bt_p, mw, vw, K):
        # TODO(synk): wrapper-side im2col blows the patch slab up K*K x; move it
        # in-kernel (VMEM halo + shift-and-accumulate matmuls) at real shapes.
        patches = _im2col(x_cbhw, K, D, w_p.shape[1])
        mw_s = jax.nn.softmax(mw.astype(jnp.float32))
        vw_s = jax.nn.softmax(vw.astype(jnp.float32))
        return _run_stage(patches, w_p, b_p, x_flat_in, g_p, bt_p, mw_s, vw_s,
                          C=C, Cp=Cp, B=B, HW=HW)

    # stage 1: C1 (k=3, dilation D) -> GLU -> n1 -> residual
    o1 = stage(x_cb, x_flat, params["w1p"], params["b1p"], params["g1p"],
               params["bt1p"], params["mw1"], params["vw1"], K=3)
    # stage 2: C2 (k=5, dilation D) -> GLU -> n2 -> residual
    o2 = stage(o1.reshape(Cp, B, H, W), o1, params["w2p"], params["b2p"],
               params["g2p"], params["bt2p"], params["mw2"], params["vw2"], K=5)

    # One exit transpose back to NCHW, dropping the channel padding.
    return jnp.transpose(o2.reshape(Cp, B, H, W), (1, 0, 2, 3))[:, :C]


# ------------------------------ pure-JAX reference (NCHW) -----------------------------
def _ref_conv(x, w_oihw, b, K, D):
    pad = (K + (K - 1) * (D - 1)) // 2
    # bf16 conv inputs / f32 accumulation to match the kernel's MXU numerics.
    y = jax.lax.conv_general_dilated(
        x.astype(jnp.bfloat16), w_oihw.astype(jnp.bfloat16),
        window_strides=(1, 1), padding=[(pad, pad), (pad, pad)],
        rhs_dilation=(D, D), dimension_numbers=("NCHW", "OIHW", "NCHW"),
        preferred_element_type=jnp.float32)
    return y + b[None, :, None, None]


def _ref_glu(y):
    c = y.shape[1] // 2
    return y[:, :c] * jax.nn.sigmoid(y[:, c:])


def _ref_switchnorm(y, gamma, beta, mw, vw, eps=_EPS):
    N, C, H, W = y.shape
    yr = y.reshape(N, C, H * W)
    mean_in = yr.mean(-1, keepdims=True)
    var_in = jnp.var(yr, axis=-1, ddof=1, keepdims=True)
    mean_ln = mean_in.mean(1, keepdims=True)
    temp = var_in + mean_in ** 2
    var_ln = temp.mean(1, keepdims=True) - mean_ln ** 2
    mean_bn = mean_in.mean(0, keepdims=True)
    var_bn = temp.mean(0, keepdims=True) - mean_bn ** 2
    mws, vws = jax.nn.softmax(mw), jax.nn.softmax(vw)
    mean = mws[0] * mean_in + mws[1] * mean_ln + mws[2] * mean_bn
    var = vws[0] * var_in + vws[1] * var_ln + vws[2] * var_bn
    yn = ((yr - mean) / jnp.sqrt(var + eps)).reshape(N, C, H, W)
    return yn * gamma[None, :, None, None] + beta[None, :, None, None]


def ref_forward(x, p, D):
    x1 = x + _ref_switchnorm(_ref_glu(_ref_conv(x, p["w1_oihw"], p["b1"], 3, D)),
                             p["g1"], p["bt1"], p["mw1"], p["vw1"])
    x2 = x1 + _ref_switchnorm(_ref_glu(_ref_conv(x1, p["w2_oihw"], p["b2"], 5, D)),
                              p["g2"], p["bt2"], p["mw2"], p["vw2"])
    return x2


# -------------------------------------------- main ------------------------------------
if __name__ == "__main__":
    B, C, H, W, D = 2, 4, 16, 16, 2
    Cp = _round_up(C, 8)

    key = jax.random.PRNGKey(0)
    k1, k2, k3, k4, k5, k6, k7, k8, k9, k10, kx = jax.random.split(key, 11)

    # Conv2d weights in PyTorch OIHW layout.
    w1_oihw = jax.random.normal(k1, (2 * C, C, 3, 3), jnp.float32) * 0.1
    b1 = jax.random.normal(k2, (2 * C,), jnp.float32) * 0.1
    w2_oihw = jax.random.normal(k3, (2 * C, C, 5, 5), jnp.float32) * 0.1
    b2 = jax.random.normal(k4, (2 * C,), jnp.float32) * 0.1
    # SwitchNorm affine / mixing weights (randomized around the default init to
    # exercise all statistics branches; still deterministic).
    g1 = 1.0 + 0.1 * jax.random.normal(k5, (C,), jnp.float32)
    bt1 = 0.1 * jax.random.normal(k6, (C,), jnp.float32)
    g2 = 1.0 + 0.1 * jax.random.normal(k7, (C,), jnp.float32)
    bt2 = 0.1 * jax.random.normal(k8, (C,), jnp.float32)
    mw1 = 0.5 * jax.random.normal(k9, (3,), jnp.float32)
    vw1 = 0.5 * jax.random.normal(k10, (3,), jnp.float32)
    mw2 = jnp.ones((3,), jnp.float32)     # SwitchNorm2d default init
    vw2 = jnp.ones((3,), jnp.float32)

    kkc1 = _round_up(3 * 3 * Cp, 128)     # 72  -> 128
    kkc2 = _round_up(5 * 5 * Cp, 128)     # 200 -> 256

    params = {
        # packed, MXU-ready params for the Pallas path
        "w1p": _pack_weight(w1_oihw, Cp, kkc1), "b1p": _pack_bias(b1, C, Cp),
        "w2p": _pack_weight(w2_oihw, Cp, kkc2), "b2p": _pack_bias(b2, C, Cp),
        "g1p": _pack_affine(g1, C, Cp), "bt1p": _pack_affine(bt1, C, Cp),
        "g2p": _pack_affine(g2, C, Cp), "bt2p": _pack_affine(bt2, C, Cp),
        "mw1": mw1, "vw1": vw1, "mw2": mw2, "vw2": vw2,
        # raw params for the pure-JAX reference
        "w1_oihw": w1_oihw, "b1": b1, "w2_oihw": w2_oihw, "b2": b2,
        "g1": g1, "bt1": bt1, "g2": g2, "bt2": bt2,
    }

    x = jax.random.normal(kx, (B, C, H, W), jnp.float32)        # NCHW like PyTorch

    fwd = jax.jit(functools.partial(covd_forward, D=D))
    out = jax.block_until_ready(fwd(x, params))
    assert out.shape == (B, C, H, W)

    ref = jax.block_until_ready(ref_forward(x, params, D))
    np.testing.assert_allclose(np.asarray(out), np.asarray(ref), rtol=5e-3, atol=5e-3)

    print("KERNEL_OK")
</pallas_src>

<mosaic_0001>
module attributes {stable_mosaic.version = 11 : i64} {
  func.func @_stage_kernel(%arg0: memref<128x512xbf16, #tpu.memory_space<vmem>>, %arg1: memref<16x128xbf16, #tpu.memory_space<vmem>>, %arg2: memref<16x1xf32, #tpu.memory_space<vmem>>, %arg3: memref<8x512xf32, #tpu.memory_space<vmem>>, %arg4: memref<8x1xf32, #tpu.memory_space<vmem>>, %arg5: memref<8x1xf32, #tpu.memory_space<vmem>>, %arg6: memref<3xf32, #tpu.memory_space<smem>>, %arg7: memref<3xf32, #tpu.memory_space<smem>>, %arg8: memref<8x512xf32, #tpu.memory_space<vmem>>) attributes {dimension_semantics = [], scalar_prefetch = 0 : i64, scratch_operands = 0 : i64, tpu.core_type = #tpu.core_type<tc>} {
    %c0 = arith.constant 0 : index
    %c0_0 = arith.constant 0 : index
    %0 = vector.load %arg1[%c0, %c0_0] : memref<16x128xbf16, #tpu.memory_space<vmem>>, vector<16x128xbf16>
    %c0_1 = arith.constant 0 : index
    %c0_2 = arith.constant 0 : index
    %1 = vector.load %arg0[%c0_1, %c0_2] : memref<128x512xbf16, #tpu.memory_space<vmem>>, vector<128x512xbf16>
    %cst = arith.constant dense<0.000000e+00> : vector<16x512xf32>
    %2 = tpu.matmul %0, %1, %cst {dimension_numbers = #tpu.dot_dimension_numbers<[1], [0], [0], [1], [0, 0, 1, 1], [], []>} : vector<16x128xbf16>, vector<128x512xbf16>, vector<16x512xf32> -> vector<16x512xf32>
    %c0_3 = arith.constant 0 : index
    %c0_4 = arith.constant 0 : index
    %3 = vector.load %arg2[%c0_3, %c0_4] : memref<16x1xf32, #tpu.memory_space<vmem>>, vector<16x1xf32>
    %4 = vector.broadcast %3 : vector<16x1xf32> to vector<16x512xf32>
    %5 = arith.addf %2, %4 : vector<16x512xf32>
    %6 = vector.extract_strided_slice %5 {offsets = [0, 0], sizes = [8, 512], strides = [1, 1]} : vector<16x512xf32> to vector<8x512xf32>
    %7 = vector.extract_strided_slice %5 {offsets = [8, 0], sizes = [8, 512], strides = [1, 1]} : vector<16x512xf32> to vector<8x512xf32>
    %8 = arith.negf %7 : vector<8x512xf32>
    %9 = math.exp %8 : vector<8x512xf32>
    %cst_5 = arith.constant 1.000000e+00 : f32
    %10 = vector.broadcast %cst_5 : f32 to vector<8x512xf32>
    %11 = arith.addf %10, %9 : vector<8x512xf32>
    %12 = arith.divf %10, %11 : vector<8x512xf32>
    %13 = arith.mulf %6, %12 : vector<8x512xf32>
    %c0_6 = arith.constant 0 : index
    %14 = memref.load %arg6[%c0_6] : memref<3xf32, #tpu.memory_space<smem>>
    %c1 = arith.constant 1 : index
    %15 = memref.load %arg6[%c1] : memref<3xf32, #tpu.memory_space<smem>>
    %c2 = arith.constant 2 : index
    %16 = memref.load %arg6[%c2] : memref<3xf32, #tpu.memory_space<smem>>
    %c0_7 = arith.constant 0 : index
    %17 = memref.load %arg7[%c0_7] : memref<3xf32, #tpu.memory_space<smem>>
    %c1_8 = arith.constant 1 : index
    %18 = memref.load %arg7[%c1_8] : memref<3xf32, #tpu.memory_space<smem>>
    %c2_9 = arith.constant 2 : index
    %19 = memref.load %arg7[%c2_9] : memref<3xf32, #tpu.memory_space<smem>>
    %20 = vector.extract_strided_slice %13 {offsets = [0, 0], sizes = [8, 256], strides = [1, 1]} : vector<8x512xf32> to vector<8x256xf32>
    %cst_10 = arith.constant dense<0.000000e+00> : vector<8xf32>
    %21 = vector.multi_reduction <add>, %20, %cst_10 [1] : vector<8x256xf32> to vector<8xf32>
    %22 = vector.shape_cast %21 : vector<8xf32> to vector<8x1xf32>
    %cst_11 = arith.constant 2.560000e+02 : f32
    %23 = vector.broadcast %cst_11 : f32 to vector<8x1xf32>
    %24 = arith.divf %22, %23 : vector<8x1xf32>
    %25 = vector.broadcast %24 : vector<8x1xf32> to vector<8x256xf32>
    %26 = arith.subf %20, %25 : vector<8x256xf32>
    %27 = arith.mulf %26, %26 : vector<8x256xf32>
    %cst_12 = arith.constant dense<0.000000e+00> : vector<8xf32>
    %28 = vector.multi_reduction <add>, %27, %cst_12 [1] : vector<8x256xf32> to vector<8xf32>
    %29 = vector.shape_cast %28 : vector<8xf32> to vector<8x1xf32>
    %cst_13 = arith.constant 0.00392156886 : f32
    %30 = vector.broadcast %cst_13 : f32 to vector<8x1xf32>
    %31 = arith.mulf %29, %30 : vector<8x1xf32>
    %32 = arith.mulf %24, %24 : vector<8x1xf32>
    %33 = arith.addf %31, %32 : vector<8x1xf32>
    %34 = vector.extract_strided_slice %13 {offsets = [0, 256], sizes = [8, 256], strides = [1, 1]} : vector<8x512xf32> to vector<8x256xf32>
    %cst_14 = arith.constant dense<0.000000e+00> : vector<8xf32>
    %35 = vector.multi_reduction <add>, %34, %cst_14 [1] : vector<8x256xf32> to vector<8xf32>
    %36 = vector.shape_cast %35 : vector<8xf32> to vector<8x1xf32>
    %cst_15 = arith.constant 2.560000e+02 : f32
    %37 = vector.broadcast %cst_15 : f32 to vector<8x1xf32>
    %38 = arith.divf %36, %37 : vector<8x1xf32>
    %39 = vector.broadcast %38 : vector<8x1xf32> to vector<8x256xf32>
    %40 = arith.subf %34, %39 : vector<8x256xf32>
    %41 = arith.mulf %40, %40 : vector<8x256xf32>
    %cst_16 = arith.constant dense<0.000000e+00> : vector<8xf32>
    %42 = vector.multi_reduction <add>, %41, %cst_16 [1] : vector<8x256xf32> to vector<8xf32>
    %43 = vector.shape_cast %42 : vector<8xf32> to vector<8x1xf32>
    %cst_17 = arith.constant 0.00392156886 : f32
    %44 = vector.broadcast %cst_17 : f32 to vector<8x1xf32>
    %45 = arith.mulf %43, %44 : vector<8x1xf32>
    %46 = arith.mulf %38, %38 : vector<8x1xf32>
    %47 = arith.addf %45, %46 : vector<8x1xf32>
    %cst_18 = arith.constant 0.000000e+00 : f32
    %48 = vector.broadcast %cst_18 : f32 to vector<8x1xf32>
    %49 = arith.addf %48, %24 : vector<8x1xf32>
    %50 = arith.addf %49, %38 : vector<8x1xf32>
    %cst_19 = arith.constant 5.000000e-01 : f32
    %51 = vector.broadcast %cst_19 : f32 to vector<8x1xf32>
    %52 = arith.mulf %50, %51 : vector<8x1xf32>
    %cst_20 = arith.constant 0.000000e+00 : f32
    %53 = vector.broadcast %cst_20 : f32 to vector<8x1xf32>
    %54 = arith.addf %53, %33 : vector<8x1xf32>
    %55 = arith.addf %54, %47 : vector<8x1xf32>
    %cst_21 = arith.constant 5.000000e-01 : f32
    %56 = vector.broadcast %cst_21 : f32 to vector<8x1xf32>
    %57 = arith.mulf %55, %56 : vector<8x1xf32>
    %58 = arith.mulf %52, %52 : vector<8x1xf32>
    %59 = arith.subf %57, %58 : vector<8x1xf32>
    %c0_22 = arith.constant 0 : index
    %c0_23 = arith.constant 0 : index
    %60 = vector.load %arg4[%c0_22, %c0_23] : memref<8x1xf32, #tpu.memory_space<vmem>>, vector<8x1xf32>
    %c0_24 = arith.constant 0 : index
    %c0_25 = arith.constant 0 : index
    %61 = vector.load %arg5[%c0_24, %c0_25] : memref<8x1xf32, #tpu.memory_space<vmem>>, vector<8x1xf32>
    %62 = vector.shape_cast %24 : vector<8x1xf32> to vector<1x8x1xf32>
    %cst_26 = arith.constant dense<0.000000e+00> : vector<1xf32>
    %63 = vector.multi_reduction <add>, %62, %cst_26 [1, 2] : vector<1x8x1xf32> to vector<1xf32>
    %64 = vector.shape_cast %63 : vector<1xf32> to vector<1x1x1xf32>
    %65 = vector.extract %64[0, 0, 0] : f32 from vector<1x1x1xf32>
    %cst_27 = arith.constant 2.500000e-01 : f32
    %66 = arith.mulf %65, %cst_27 : f32
    %67 = vector.shape_cast %33 : vector<8x1xf32> to vector<1x8x1xf32>
    %cst_28 = arith.constant dense<0.000000e+00> : vector<1xf32>
    %68 = vector.multi_reduction <add>, %67, %cst_28 [1, 2] : vector<1x8x1xf32> to vector<1xf32>
    %69 = vector.shape_cast %68 : vector<1xf32> to vector<1x1x1xf32>
    %70 = vector.extract %69[0, 0, 0] : f32 from vector<1x1x1xf32>
    %cst_29 = arith.constant 2.500000e-01 : f32
    %71 = arith.mulf %70, %cst_29 : f32
    %72 = arith.mulf %66, %66 : f32
    %73 = arith.subf %71, %72 : f32
    %74 = vector.broadcast %14 : f32 to vector<8x1xf32>
    %75 = arith.mulf %74, %24 : vector<8x1xf32>
    %76 = arith.mulf %15, %66 : f32
    %77 = vector.broadcast %76 : f32 to vector<8x1xf32>
    %78 = arith.addf %75, %77 : vector<8x1xf32>
    %79 = vector.broadcast %16 : f32 to vector<8x1xf32>
    %80 = arith.mulf %79, %52 : vector<8x1xf32>
    %81 = arith.addf %78, %80 : vector<8x1xf32>
    %82 = vector.broadcast %17 : f32 to vector<8x1xf32>
    %83 = arith.mulf %82, %31 : vector<8x1xf32>
    %84 = arith.mulf %18, %73 : f32
    %85 = vector.broadcast %84 : f32 to vector<8x1xf32>
    %86 = arith.addf %83, %85 : vector<8x1xf32>
    %87 = vector.broadcast %19 : f32 to vector<8x1xf32>
    %88 = arith.mulf %87, %59 : vector<8x1xf32>
    %89 = arith.addf %86, %88 : vector<8x1xf32>
    %cst_30 = arith.constant 9.99999974E-6 : f32
    %90 = vector.broadcast %cst_30 : f32 to vector<8x1xf32>
    %91 = arith.addf %89, %90 : vector<8x1xf32>
    %92 = math.rsqrt %91 : vector<8x1xf32>
    %93 = arith.mulf %60, %92 : vector<8x1xf32>
    %94 = arith.mulf %81, %93 : vector<8x1xf32>
    %95 = arith.subf %61, %94 : vector<8x1xf32>
    %c0_31 = arith.constant 0 : index
    %c0_32 = arith.constant 0 : index
    %96 = vector.load %arg3[%c0_31, %c0_32] : memref<8x512xf32, #tpu.memory_space<vmem>>, vector<8x256xf32>
    %97 = vector.extract_strided_slice %13 {offsets = [0, 0], sizes = [8, 256], strides = [1, 1]} : vector<8x512xf32> to vector<8x256xf32>
    %98 = vector.broadcast %93 : vector<8x1xf32> to vector<8x256xf32>
    %99 = arith.mulf %97, %98 : vector<8x256xf32>
    %100 = arith.addf %96, %99 : vector<8x256xf32>
    %101 = vector.broadcast %95 : vector<8x1xf32> to vector<8x256xf32>
    %102 = arith.addf %100, %101 : vector<8x256xf32>
    %c0_33 = arith.constant 0 : index
    %c0_34 = arith.constant 0 : index
    %103 = vector.load %arg8[%c0_33, %c0_34] : memref<8x512xf32, #tpu.memory_space<vmem>>, vector<8x256xf32>
    tpu.vector_store %arg8[%c0_33, %c0_34], %102 {strides = array<i32>} : memref<8x512xf32, #tpu.memory_space<vmem>>, vector<8x256xf32>,
    %104 = vector.shape_cast %38 : vector<8x1xf32> to vector<1x8x1xf32>
    %cst_35 = arith.constant dense<0.000000e+00> : vector<1xf32>
    %105 = vector.multi_reduction <add>, %104, %cst_35 [1, 2] : vector<1x8x1xf32> to vector<1xf32>
    %106 = vector.shape_cast %105 : vector<1xf32> to vector<1x1x1xf32>
    %107 = vector.extract %106[0, 0, 0] : f32 from vector<1x1x1xf32>
    %cst_36 = arith.constant 2.500000e-01 : f32
    %108 = arith.mulf %107, %cst_36 : f32
    %109 = vector.shape_cast %47 : vector<8x1xf32> to vector<1x8x1xf32>
    %cst_37 = arith.constant dense<0.000000e+00> : vector<1xf32>
    %110 = vector.multi_reduction <add>, %109, %cst_37 [1, 2] : vector<1x8x1xf32> to vector<1xf32>
    %111 = vector.shape_cast %110 : vector<1xf32> to vector<1x1x1xf32>
    %112 = vector.extract %111[0, 0, 0] : f32 from vector<1x1x1xf32>
    %cst_38 = arith.constant 2.500000e-01 : f32
    %113 = arith.mulf %112, %cst_38 : f32
    %114 = arith.mulf %108, %108 : f32
    %115 = arith.subf %113, %114 : f32
    %116 = vector.broadcast %14 : f32 to vector<8x1xf32>
    %117 = arith.mulf %116, %38 : vector<8x1xf32>
    %118 = arith.mulf %15, %108 : f32
    %119 = vector.broadcast %118 : f32 to vector<8x1xf32>
    %120 = arith.addf %117, %119 : vector<8x1xf32>
    %121 = vector.broadcast %16 : f32 to vector<8x1xf32>
    %122 = arith.mulf %121, %52 : vector<8x1xf32>
    %123 = arith.addf %120, %122 : vector<8x1xf32>
    %124 = vector.broadcast %17 : f32 to vector<8x1xf32>
    %125 = arith.mulf %124, %45 : vector<8x1xf32>
    %126 = arith.mulf %18, %115 : f32
    %127 = vector.broadcast %126 : f32 to vector<8x1xf32>
    %128 = arith.addf %125, %127 : vector<8x1xf32>
    %129 = vector.broadcast %19 : f32 to vector<8x1xf32>
    %130 = arith.mulf %129, %59 : vector<8x1xf32>
    %131 = arith.addf %128, %130 : vector<8x1xf32>
    %cst_39 = arith.constant 9.99999974E-6 : f32
    %132 = vector.broadcast %cst_39 : f32 to vector<8x1xf32>
    %133 = arith.addf %131, %132 : vector<8x1xf32>
    %134 = math.rsqrt %133 : vector<8x1xf32>
    %135 = arith.mulf %60, %134 : vector<8x1xf32>
    %136 = arith.mulf %123, %135 : vector<8x1xf32>
    %137 = arith.subf %61, %136 : vector<8x1xf32>
    %c0_40 = arith.constant 0 : index
    %c256 = arith.constant 256 : index
    %138 = vector.load %arg3[%c0_40, %c256] : memref<8x512xf32, #tpu.memory_space<vmem>>, vector<8x256xf32>
    %139 = vector.extract_strided_slice %13 {offsets = [0, 256], sizes = [8, 256], strides = [1, 1]} : vector<8x512xf32> to vector<8x256xf32>
    %140 = vector.broadcast %135 : vector<8x1xf32> to vector<8x256xf32>
    %141 = arith.mulf %139, %140 : vector<8x256xf32>
    %142 = arith.addf %138, %141 : vector<8x256xf32>
    %143 = vector.broadcast %137 : vector<8x1xf32> to vector<8x256xf32>
    %144 = arith.addf %142, %143 : vector<8x256xf32>
    %c0_41 = arith.constant 0 : index
    %c256_42 = arith.constant 256 : index
    %145 = vector.load %arg8[%c0_41, %c256_42] : memref<8x512xf32, #tpu.memory_space<vmem>>, vector<8x256xf32>
    tpu.vector_store %arg8[%c0_41, %c256_42], %144 {strides = array<i32>} : memref<8x512xf32, #tpu.memory_space<vmem>>, vector<8x256xf32>,
    return
  }
}

module attributes {stable_mosaic.version = 11 : i64} {
  func.func @_stage_kernel(%arg0: memref<256x512xbf16, #tpu.memory_space<vmem>>, %arg1: memref<16x256xbf16, #tpu.memory_space<vmem>>, %arg2: memref<16x1xf32, #tpu.memory_space<vmem>>, %arg3: memref<8x512xf32, #tpu.memory_space<vmem>>, %arg4: memref<8x1xf32, #tpu.memory_space<vmem>>, %arg5: memref<8x1xf32, #tpu.memory_space<vmem>>, %arg6: memref<3xf32, #tpu.memory_space<smem>>, %arg7: memref<3xf32, #tpu.memory_space<smem>>, %arg8: memref<8x512xf32, #tpu.memory_space<vmem>>) attributes {dimension_semantics = [], scalar_prefetch = 0 : i64, scratch_operands = 0 : i64, tpu.core_type = #tpu.core_type<tc>} {
    %c0 = arith.constant 0 : index
    %c0_0 = arith.constant 0 : index
    %0 = vector.load %arg1[%c0, %c0_0] : memref<16x256xbf16, #tpu.memory_space<vmem>>, vector<16x256xbf16>
    %c0_1 = arith.constant 0 : index
    %c0_2 = arith.constant 0 : index
    %1 = vector.load %arg0[%c0_1, %c0_2] : memref<256x512xbf16, #tpu.memory_space<vmem>>, vector<256x512xbf16>
    %cst = arith.constant dense<0.000000e+00> : vector<16x512xf32>
    %2 = tpu.matmul %0, %1, %cst {dimension_numbers = #tpu.dot_dimension_numbers<[1], [0], [0], [1], [0, 0, 1, 1], [], []>} : vector<16x256xbf16>, vector<256x512xbf16>, vector<16x512xf32> -> vector<16x512xf32>
    %c0_3 = arith.constant 0 : index
    %c0_4 = arith.constant 0 : index
    %3 = vector.load %arg2[%c0_3, %c0_4] : memref<16x1xf32, #tpu.memory_space<vmem>>, vector<16x1xf32>
    %4 = vector.broadcast %3 : vector<16x1xf32> to vector<16x512xf32>
    %5 = arith.addf %2, %4 : vector<16x512xf32>
    %6 = vector.extract_strided_slice %5 {offsets = [0, 0], sizes = [8, 512], strides = [1, 1]} : vector<16x512xf32> to vector<8x512xf32>
    %7 = vector.extract_strided_slice %5 {offsets = [8, 0], sizes = [8, 512], strides = [1, 1]} : vector<16x512xf32> to vector<8x512xf32>
    %8 = arith.negf %7 : vector<8x512xf32>
    %9 = math.exp %8 : vector<8x512xf32>
    %cst_5 = arith.constant 1.000000e+00 : f32
    %10 = vector.broadcast %cst_5 : f32 to vector<8x512xf32>
    %11 = arith.addf %10, %9 : vector<8x512xf32>
    %12 = arith.divf %10, %11 : vector<8x512xf32>
    %13 = arith.mulf %6, %12 : vector<8x512xf32>
    %c0_6 = arith.constant 0 : index
    %14 = memref.load %arg6[%c0_6] : memref<3xf32, #tpu.memory_space<smem>>
    %c1 = arith.constant 1 : index
    %15 = memref.load %arg6[%c1] : memref<3xf32, #tpu.memory_space<smem>>
    %c2 = arith.constant 2 : index
    %16 = memref.load %arg6[%c2] : memref<3xf32, #tpu.memory_space<smem>>
    %c0_7 = arith.constant 0 : index
    %17 = memref.load %arg7[%c0_7] : memref<3xf32, #tpu.memory_space<smem>>
    %c1_8 = arith.constant 1 : index
    %18 = memref.load %arg7[%c1_8] : memref<3xf32, #tpu.memory_space<smem>>
    %c2_9 = arith.constant 2 : index
    %19 = memref.load %arg7[%c2_9] : memref<3xf32, #tpu.memory_space<smem>>
    %20 = vector.extract_strided_slice %13 {offsets = [0, 0], sizes = [8, 256], strides = [1, 1]} : vector<8x512xf32> to vector<8x256xf32>
    %cst_10 = arith.constant dense<0.000000e+00> : vector<8xf32>
    %21 = vector.multi_reduction <add>, %20, %cst_10 [1] : vector<8x256xf32> to vector<8xf32>
    %22 = vector.shape_cast %21 : vector<8xf32> to vector<8x1xf32>
    %cst_11 = arith.constant 2.560000e+02 : f32
    %23 = vector.broadcast %cst_11 : f32 to vector<8x1xf32>
    %24 = arith.divf %22, %23 : vector<8x1xf32>
    %25 = vector.broadcast %24 : vector<8x1xf32> to vector<8x256xf32>
    %26 = arith.subf %20, %25 : vector<8x256xf32>
    %27 = arith.mulf %26, %26 : vector<8x256xf32>
    %cst_12 = arith.constant dense<0.000000e+00> : vector<8xf32>
    %28 = vector.multi_reduction <add>, %27, %cst_12 [1] : vector<8x256xf32> to vector<8xf32>
    %29 = vector.shape_cast %28 : vector<8xf32> to vector<8x1xf32>
    %cst_13 = arith.constant 0.00392156886 : f32
    %30 = vector.broadcast %cst_13 : f32 to vector<8x1xf32>
    %31 = arith.mulf %29, %30 : vector<8x1xf32>
    %32 = arith.mulf %24, %24 : vector<8x1xf32>
    %33 = arith.addf %31, %32 : vector<8x1xf32>
    %34 = vector.extract_strided_slice %13 {offsets = [0, 256], sizes = [8, 256], strides = [1, 1]} : vector<8x512xf32> to vector<8x256xf32>
    %cst_14 = arith.constant dense<0.000000e+00> : vector<8xf32>
    %35 = vector.multi_reduction <add>, %34, %cst_14 [1] : vector<8x256xf32> to vector<8xf32>
    %36 = vector.shape_cast %35 : vector<8xf32> to vector<8x1xf32>
    %cst_15 = arith.constant 2.560000e+02 : f32
    %37 = vector.broadcast %cst_15 : f32 to vector<8x1xf32>
    %38 = arith.divf %36, %37 : vector<8x1xf32>
    %39 = vector.broadcast %38 : vector<8x1xf32> to vector<8x256xf32>
    %40 = arith.subf %34, %39 : vector<8x256xf32>
    %41 = arith.mulf %40, %40 : vector<8x256xf32>
    %cst_16 = arith.constant dense<0.000000e+00> : vector<8xf32>
    %42 = vector.multi_reduction <add>, %41, %cst_16 [1] : vector<8x256xf32> to vector<8xf32>
    %43 = vector.shape_cast %42 : vector<8xf32> to vector<8x1xf32>
    %cst_17 = arith.constant 0.00392156886 : f32
    %44 = vector.broadcast %cst_17 : f32 to vector<8x1xf32>
    %45 = arith.mulf %43, %44 : vector<8x1xf32>
    %46 = arith.mulf %38, %38 : vector<8x1xf32>
    %47 = arith.addf %45, %46 : vector<8x1xf32>
    %cst_18 = arith.constant 0.000000e+00 : f32
    %48 = vector.broadcast %cst_18 : f32 to vector<8x1xf32>
    %49 = arith.addf %48, %24 : vector<8x1xf32>
    %50 = arith.addf %49, %38 : vector<8x1xf32>
    %cst_19 = arith.constant 5.000000e-01 : f32
    %51 = vector.broadcast %cst_19 : f32 to vector<8x1xf32>
    %52 = arith.mulf %50, %51 : vector<8x1xf32>
    %cst_20 = arith.constant 0.000000e+00 : f32
    %53 = vector.broadcast %cst_20 : f32 to vector<8x1xf32>
    %54 = arith.addf %53, %33 : vector<8x1xf32>
    %55 = arith.addf %54, %47 : vector<8x1xf32>
    %cst_21 = arith.constant 5.000000e-01 : f32
    %56 = vector.broadcast %cst_21 : f32 to vector<8x1xf32>
    %57 = arith.mulf %55, %56 : vector<8x1xf32>
    %58 = arith.mulf %52, %52 : vector<8x1xf32>
    %59 = arith.subf %57, %58 : vector<8x1xf32>
    %c0_22 = arith.constant 0 : index
    %c0_23 = arith.constant 0 : index
    %60 = vector.load %arg4[%c0_22, %c0_23] : memref<8x1xf32, #tpu.memory_space<vmem>>, vector<8x1xf32>
    %c0_24 = arith.constant 0 : index
    %c0_25 = arith.constant 0 : index
    %61 = vector.load %arg5[%c0_24, %c0_25] : memref<8x1xf32, #tpu.memory_space<vmem>>, vector<8x1xf32>
    %62 = vector.shape_cast %24 : vector<8x1xf32> to vector<1x8x1xf32>
    %cst_26 = arith.constant dense<0.000000e+00> : vector<1xf32>
    %63 = vector.multi_reduction <add>, %62, %cst_26 [1, 2] : vector<1x8x1xf32> to vector<1xf32>
    %64 = vector.shape_cast %63 : vector<1xf32> to vector<1x1x1xf32>
    %65 = vector.extract %64[0, 0, 0] : f32 from vector<1x1x1xf32>
    %cst_27 = arith.constant 2.500000e-01 : f32
    %66 = arith.mulf %65, %cst_27 : f32
    %67 = vector.shape_cast %33 : vector<8x1xf32> to vector<1x8x1xf32>
    %cst_28 = arith.constant dense<0.000000e+00> : vector<1xf32>
    %68 = vector.multi_reduction <add>, %67, %cst_28 [1, 2] : vector<1x8x1xf32> to vector<1xf32>
    %69 = vector.shape_cast %68 : vector<1xf32> to vector<1x1x1xf32>
    %70 = vector.extract %69[0, 0, 0] : f32 from vector<1x1x1xf32>
    %cst_29 = arith.constant 2.500000e-01 : f32
    %71 = arith.mulf %70, %cst_29 : f32
    %72 = arith.mulf %66, %66 : f32
    %73 = arith.subf %71, %72 : f32
    %74 = vector.broadcast %14 : f32 to vector<8x1xf32>
    %75 = arith.mulf %74, %24 : vector<8x1xf32>
    %76 = arith.mulf %15, %66 : f32
    %77 = vector.broadcast %76 : f32 to vector<8x1xf32>
    %78 = arith.addf %75, %77 : vector<8x1xf32>
    %79 = vector.broadcast %16 : f32 to vector<8x1xf32>
    %80 = arith.mulf %79, %52 : vector<8x1xf32>
    %81 = arith.addf %78, %80 : vector<8x1xf32>
    %82 = vector.broadcast %17 : f32 to vector<8x1xf32>
    %83 = arith.mulf %82, %31 : vector<8x1xf32>
    %84 = arith.mulf %18, %73 : f32
    %85 = vector.broadcast %84 : f32 to vector<8x1xf32>
    %86 = arith.addf %83, %85 : vector<8x1xf32>
    %87 = vector.broadcast %19 : f32 to vector<8x1xf32>
    %88 = arith.mulf %87, %59 : vector<8x1xf32>
    %89 = arith.addf %86, %88 : vector<8x1xf32>
    %cst_30 = arith.constant 9.99999974E-6 : f32
    %90 = vector.broadcast %cst_30 : f32 to vector<8x1xf32>
    %91 = arith.addf %89, %90 : vector<8x1xf32>
    %92 = math.rsqrt %91 : vector<8x1xf32>
    %93 = arith.mulf %60, %92 : vector<8x1xf32>
    %94 = arith.mulf %81, %93 : vector<8x1xf32>
    %95 = arith.subf %61, %94 : vector<8x1xf32>
    %c0_31 = arith.constant 0 : index
    %c0_32 = arith.constant 0 : index
    %96 = vector.load %arg3[%c0_31, %c0_32] : memref<8x512xf32, #tpu.memory_space<vmem>>, vector<8x256xf32>
    %97 = vector.extract_strided_slice %13 {offsets = [0, 0], sizes = [8, 256], strides = [1, 1]} : vector<8x512xf32> to vector<8x256xf32>
    %98 = vector.broadcast %93 : vector<8x1xf32> to vector<8x256xf32>
    %99 = arith.mulf %97, %98 : vector<8x256xf32>
    %100 = arith.addf %96, %99 : vector<8x256xf32>
    %101 = vector.broadcast %95 : vector<8x1xf32> to vector<8x256xf32>
    %102 = arith.addf %100, %101 : vector<8x256xf32>
    %c0_33 = arith.constant 0 : index
    %c0_34 = arith.constant 0 : index
    %103 = vector.load %arg8[%c0_33, %c0_34] : memref<8x512xf32, #tpu.memory_space<vmem>>, vector<8x256xf32>
    tpu.vector_store %arg8[%c0_33, %c0_34], %102 {strides = array<i32>} : memref<8x512xf32, #tpu.memory_space<vmem>>, vector<8x256xf32>,
    %104 = vector.shape_cast %38 : vector<8x1xf32> to vector<1x8x1xf32>
    %cst_35 = arith.constant dense<0.000000e+00> : vector<1xf32>
    %105 = vector.multi_reduction <add>, %104, %cst_35 [1, 2] : vector<1x8x1xf32> to vector<1xf32>
    %106 = vector.shape_cast %105 : vector<1xf32> to vector<1x1x1xf32>
    %107 = vector.extract %106[0, 0, 0] : f32 from vector<1x1x1xf32>
    %cst_36 = arith.constant 2.500000e-01 : f32
    %108 = arith.mulf %107, %cst_36 : f32
    %109 = vector.shape_cast %47 : vector<8x1xf32> to vector<1x8x1xf32>
    %cst_37 = arith.constant dense<0.000000e+00> : vector<1xf32>
    %110 = vector.multi_reduction <add>, %109, %cst_37 [1, 2] : vector<1x8x1xf32> to vector<1xf32>
    %111 = vector.shape_cast %110 : vector<1xf32> to vector<1x1x1xf32>
    %112 = vector.extract %111[0, 0, 0] : f32 from vector<1x1x1xf32>
    %cst_38 = arith.constant 2.500000e-01 : f32
    %113 = arith.mulf %112, %cst_38 : f32
    %114 = arith.mulf %108, %108 : f32
    %115 = arith.subf %113, %114 : f32
    %116 = vector.broadcast %14 : f32 to vector<8x1xf32>
    %117 = arith.mulf %116, %38 : vector<8x1xf32>
    %118 = arith.mulf %15, %108 : f32
    %119 = vector.broadcast %118 : f32 to vector<8x1xf32>
    %120 = arith.addf %117, %119 : vector<8x1xf32>
    %121 = vector.broadcast %16 : f32 to vector<8x1xf32>
    %122 = arith.mulf %121, %52 : vector<8x1xf32>
    %123 = arith.addf %120, %122 : vector<8x1xf32>
    %124 = vector.broadcast %17 : f32 to vector<8x1xf32>
    %125 = arith.mulf %124, %45 : vector<8x1xf32>
    %126 = arith.mulf %18, %115 : f32
    %127 = vector.broadcast %126 : f32 to vector<8x1xf32>
    %128 = arith.addf %125, %127 : vector<8x1xf32>
    %129 = vector.broadcast %19 : f32 to vector<8x1xf32>
    %130 = arith.mulf %129, %59 : vector<8x1xf32>
    %131 = arith.addf %128, %130 : vector<8x1xf32>
    %cst_39 = arith.constant 9.99999974E-6 : f32
    %132 = vector.broadcast %cst_39 : f32 to vector<8x1xf32>
    %133 = arith.addf %131, %132 : vector<8x1xf32>
    %134 = math.rsqrt %133 : vector<8x1xf32>
    %135 = arith.mulf %60, %134 : vector<8x1xf32>
    %136 = arith.mulf %123, %135 : vector<8x1xf32>
    %137 = arith.subf %61, %136 : vector<8x1xf32>
    %c0_40 = arith.constant 0 : index
    %c256 = arith.constant 256 : index
    %138 = vector.load %arg3[%c0_40, %c256] : memref<8x512xf32, #tpu.memory_space<vmem>>, vector<8x256xf32>
    %139 = vector.extract_strided_slice %13 {offsets = [0, 256], sizes = [8, 256], strides = [1, 1]} : vector<8x512xf32> to vector<8x256xf32>
    %140 = vector.broadcast %135 : vector<8x1xf32> to vector<8x256xf32>
    %141 = arith.mulf %139, %140 : vector<8x256xf32>
    %142 = arith.addf %138, %141 : vector<8x256xf32>
    %143 = vector.broadcast %137 : vector<8x1xf32> to vector<8x256xf32>
    %144 = arith.addf %142, %143 : vector<8x256xf32>
    %c0_41 = arith.constant 0 : index
    %c256_42 = arith.constant 256 : index
    %145 = vector.load %arg8[%c0_41, %c256_42] : memref<8x512xf32, #tpu.memory_space<vmem>>, vector<8x256xf32>
    tpu.vector_store %arg8[%c0_41, %c256_42], %144 {strides = array<i32>} : memref<8x512xf32, #tpu.memory_space<vmem>>, vector<8x256xf32>,
    return
  }
}

</mosaic_0001>

<llo_original>
// kernel: covd_forward.2
$region0: #{covd_forward.2}
  #allocation0 [shape = 'u32[]', space=smem, size = 0x4, offset = 0x4, fixed_abs, tag = 'smem constant byte address 0x4 - core index']
  #allocation1 [shape = 'u32[144,128]{1,0:T(1,128)}', space=vmem, size = 0x12000, scoped, tag = 'internal scratch']
  %s0 = inlined_call_operand.vmem [shape: bf16[128,512], index: 0, kind: input, shape index: {}]
  %s1 = inlined_call_operand.vmem [shape: bf16[16,128], index: 1, kind: input, shape index: {}]
  %s2 = inlined_call_operand.vmem [shape: f32[16,1], index: 2, kind: input, shape index: {}]
  %s3 = inlined_call_operand.vmem [shape: f32[8,512], index: 3, kind: input, shape index: {}]
  %s4 = inlined_call_operand.vmem [shape: f32[8,1], index: 4, kind: input, shape index: {}]
  %s5 = inlined_call_operand.vmem [shape: f32[8,1], index: 5, kind: input, shape index: {}]
  %s6 = inlined_call_operand.vmem [shape: f32[3], index: 6, kind: input, shape index: {}]
  %s7 = inlined_call_operand.vmem [shape: f32[3], index: 7, kind: input, shape index: {}]
  %s8 = inlined_call_operand.vmem [shape: f32[8,512], index: 8, kind: output, shape index: {}]
  %s9 = sld [smem:[#allocation0]]
  $region50: #{covd_forward.2} parent=0
    _
  %s11 = ssub.s32 1, %s9
  %s12 = scalar_select 0, %s11, %s9
  $region1: #{covd_forward.2} parent=0
    #allocation2 [shape = 'u8[512]{0}', space=smem, size = 0x200, scoped, tag = 'input window, operand 6, single buffered']
    #allocation3 [shape = 's32[1]{0}', space=sflag, size = 0x4, scoped, tag = 'scoped memory for covd_forward.2']
    #allocation4 [shape = 'u8[512]{0}', space=smem, size = 0x200, scoped, tag = 'input window, operand 7, single buffered']
    #allocation5 [shape = 's32[1]{0}', space=sflag, size = 0x4, scoped, tag = 'scoped memory for covd_forward.2']
    %13 = vsyncpa [#allocation3], 0
    %14 = vsyncpa [#allocation5], 0
    // Predicated region
    $region2: #{covd_forward.2} parent=1 // pred_check
      _
    $region3: #{covd_forward.2} parent=1 // pred_check_branch
      %16 = sbr.rel (0) target = $region5
    $region4: #{covd_forward.2} parent=1 // pred_region
      _
    $region5: #{covd_forward.2} parent=1 // pred_fallthru
      _
    // Predicated region
    $region6: #{covd_forward.2} parent=1 // pred_check
      _
    $region7: #{covd_forward.2} parent=1 // pred_check_branch
      %18 = sbr.rel (0) target = $region9
    $region8: #{covd_forward.2} parent=1 // pred_region
      _
    $region9: #{covd_forward.2} parent=1 // pred_fallthru
      _
    // Predicated region
    $region10: #{covd_forward.2} parent=1 // pred_check
      _
    $region11: #{covd_forward.2} parent=1 // pred_check_branch
      %20 = sbr.rel (0) target = $region13
    $region12: #{covd_forward.2} parent=1 // pred_region
      _
    $region13: #{covd_forward.2} parent=1 // pred_fallthru
      _
    // Predicated region
    $region14: #{covd_forward.2} parent=1 // pred_check
      _
    $region15: #{covd_forward.2} parent=1 // pred_check_branch
      %22 = sbr.rel (0) target = $region17
    $region16: #{covd_forward.2} parent=1 // pred_region
      _
    $region17: #{covd_forward.2} parent=1 // pred_fallthru
      _
    // Predicated region
    $region18: #{covd_forward.2} parent=1 // pred_check
      _
    $region19: #{covd_forward.2} parent=1 // pred_check_branch
      %24 = sbr.rel (0) target = $region21
    $region20: #{covd_forward.2} parent=1 // pred_region
      _
    $region21: #{covd_forward.2} parent=1 // pred_fallthru
      _
    // Predicated region
    $region22: #{covd_forward.2} parent=1 // pred_check
      _
    $region23: #{covd_forward.2} parent=1 // pred_check_branch
      %26 = sbr.rel (0) target = $region25
    $region24: #{covd_forward.2} parent=1 // pred_region
      _
    $region25: #{covd_forward.2} parent=1 // pred_fallthru
      _
    // Predicated region
    $region26: #{covd_forward.2} parent=1 // pred_check
      _
    $region27: #{covd_forward.2} parent=1 // pred_check_branch
      %28 = sbr.rel (0) target = $region29
    $region28: #{covd_forward.2} parent=1 // pred_region
      %s30 = ssub.s32 16, 16
      %31 = vsyncadd [#allocation3], %s30
      %s33 = sshll.u32 %s6, 4
      %s34 = int_to_ptr.vmem [resolvable:$true] %s33
      %36 = dma.vmem_to_smem %s34, 16, [#allocation2], [#allocation3]
    $region29: #{covd_forward.2} parent=1 // pred_fallthru
      _
    // Predicated region
    $region30: #{covd_forward.2} parent=1 // pred_check
      _
    $region31: #{covd_forward.2} parent=1 // pred_check_branch
      %38 = sbr.rel (0) target = $region33
    $region32: #{covd_forward.2} parent=1 // pred_region
      %s40 = ssub.s32 16, 16
      %41 = vsyncadd [#allocation5], %s40
      %s43 = sshll.u32 %s7, 4
      %s44 = int_to_ptr.vmem [resolvable:$true] %s43
      %46 = dma.vmem_to_smem %s44, 16, [#allocation4], [#allocation5]
    $region33: #{covd_forward.2} parent=1 // pred_fallthru
      _
    // Predicated region
    $region34: #{covd_forward.2} parent=1 // pred_check
      _
    $region35: #{covd_forward.2} parent=1 // pred_check_branch
      %48 = sbr.rel (0) target = $region37
    $region36: #{covd_forward.2} parent=1 // pred_region
      %49 = dma.done [#allocation3], 16
    $region37: #{covd_forward.2} parent=1 // pred_fallthru
      _
    // Predicated region
    $region38: #{covd_forward.2} parent=1 // pred_check
      _
    $region39: #{covd_forward.2} parent=1 // pred_check_branch
      %51 = sbr.rel (0) target = $region41
    $region40: #{covd_forward.2} parent=1 // pred_region
      %52 = dma.done [#allocation5], 16
    $region41: #{covd_forward.2} parent=1 // pred_fallthru
      _
    %53 = sfence
    %v55 = vld [vmem:[%s1] sm:$0xf]
    %v56 = vld [vmem:[%s1 + $0x4] sm:$0xf]
    %v57 = vld [vmem:[%s0] sm:$0xff]
    %v58 = vld [vmem:[%s0 + $0x8] sm:$0xff]
    %v59 = vld [vmem:[%s0 + $0x10] sm:$0xff]
    %v60 = vld [vmem:[%s0 + $0x18] sm:$0xff]
    %v61 = vld [vmem:[%s0 + $0x20] sm:$0xff]
    %v62 = vld [vmem:[%s0 + $0x28] sm:$0xff]
    %v63 = vld [vmem:[%s0 + $0x30] sm:$0xff]
    %v64 = vld [vmem:[%s0 + $0x38] sm:$0xff]
    %v65 = vld [vmem:[%s0 + $0x40] sm:$0xff]
    %v66 = vld [vmem:[%s0 + $0x48] sm:$0xff]
    %v67 = vld [vmem:[%s0 + $0x50] sm:$0xff]
    %v68 = vld [vmem:[%s0 + $0x58] sm:$0xff]
    %v69 = vld [vmem:[%s0 + $0x60] sm:$0xff]
    %v70 = vld [vmem:[%s0 + $0x68] sm:$0xff]
    %v71 = vld [vmem:[%s0 + $0x70] sm:$0xff]
    %v72 = vld [vmem:[%s0 + $0x78] sm:$0xff]
    %v73 = vld [vmem:[%s0 + $0x80] sm:$0xff]
    %v74 = vld [vmem:[%s0 + $0x88] sm:$0xff]
    %v75 = vld [vmem:[%s0 + $0x90] sm:$0xff]
    %v76 = vld [vmem:[%s0 + $0x98] sm:$0xff]
    %v77 = vld [vmem:[%s0 + $0xa0] sm:$0xff]
    %v78 = vld [vmem:[%s0 + $0xa8] sm:$0xff]
    %v79 = vld [vmem:[%s0 + $0xb0] sm:$0xff]
    %v80 = vld [vmem:[%s0 + $0xb8] sm:$0xff]
    %v81 = vld [vmem:[%s0 + $0xc0] sm:$0xff]
    %v82 = vld [vmem:[%s0 + $0xc8] sm:$0xff]
    %v83 = vld [vmem:[%s0 + $0xd0] sm:$0xff]
    %v84 = vld [vmem:[%s0 + $0xd8] sm:$0xff]
    %v85 = vld [vmem:[%s0 + $0xe0] sm:$0xff]
    %v86 = vld [vmem:[%s0 + $0xe8] sm:$0xff]
    %v87 = vld [vmem:[%s0 + $0xf0] sm:$0xff]
    %v88 = vld [vmem:[%s0 + $0xf8] sm:$0xff]
    %v89 = vld [vmem:[%s2] sm:$0xff]
    %v90 = vld [vmem:[%s2 + $0x8] sm:$0xff]
    %92 = vset.pattern.permute.xlu0 0
    %93 = vperm.xlu0 %92, %v89
    %v94 = vpop.permute.xlu0 %93
    %97 = vset.pattern.permute.xlu0 0
    %98 = vperm.xlu0 %97, %v90
    %v99 = vpop.permute.xlu0 %98
    %v103 = vunpack.c.l.b16 %v55
    %v104 = vunpack.c.l.b16 %v56
    %v105 = vpack.c.b16 %v104, %v103
    %v139 = vunpack.c.l.b16 %v57
    %v140 = vunpack.c.h.b16 %v57
    %v141 = vunpack.c.l.b16 %v58
    %v142 = vunpack.c.h.b16 %v58
    %v143 = vunpack.c.l.b16 %v59
    %v144 = vunpack.c.h.b16 %v59
    %v145 = vunpack.c.l.b16 %v60
    %v146 = vunpack.c.h.b16 %v60
    %v147 = vunpack.c.l.b16 %v61
    %v148 = vunpack.c.h.b16 %v61
    %v149 = vunpack.c.l.b16 %v62
    %v150 = vunpack.c.h.b16 %v62
    %v151 = vunpack.c.l.b16 %v63
    %v152 = vunpack.c.h.b16 %v63
    %v153 = vunpack.c.l.b16 %v64
    %v154 = vunpack.c.h.b16 %v64
    %v155 = vunpack.c.l.b16 %v65
    %v156 = vunpack.c.h.b16 %v65
    %v157 = vunpack.c.l.b16 %v66
    %v158 = vunpack.c.h.b16 %v66
    %v159 = vunpack.c.l.b16 %v67
    %v160 = vunpack.c.h.b16 %v67
    %v161 = vunpack.c.l.b16 %v68
    %v162 = vunpack.c.h.b16 %v68
    %v163 = vunpack.c.l.b16 %v69
    %v164 = vunpack.c.h.b16 %v69
    %v165 = vunpack.c.l.b16 %v70
    %v166 = vunpack.c.h.b16 %v70
    %v167 = vunpack.c.l.b16 %v71
    %v168 = vunpack.c.h.b16 %v71
    %v169 = vunpack.c.l.b16 %v72
    %v170 = vunpack.c.h.b16 %v72
    %v171 = vunpack.c.l.b16 %v73
    %v172 = vunpack.c.h.b16 %v73
    %v173 = vunpack.c.l.b16 %v74
    %v174 = vunpack.c.h.b16 %v74
    %v175 = vunpack.c.l.b16 %v75
    %v176 = vunpack.c.h.b16 %v75
    %v177 = vunpack.c.l.b16 %v76
    %v178 = vunpack.c.h.b16 %v76
    %v179 = vunpack.c.l.b16 %v77
    %v180 = vunpack.c.h.b16 %v77
    %v181 = vunpack.c.l.b16 %v78
    %v182 = vunpack.c.h.b16 %v78
    %v183 = vunpack.c.l.b16 %v79
    %v184 = vunpack.c.h.b16 %v79
    %v185 = vunpack.c.l.b16 %v80
    %v186 = vunpack.c.h.b16 %v80
    %v187 = vunpack.c.l.b16 %v81
    %v188 = vunpack.c.h.b16 %v81
    %v189 = vunpack.c.l.b16 %v82
    %v190 = vunpack.c.h.b16 %v82
    %v191 = vunpack.c.l.b16 %v83
    %v192 = vunpack.c.h.b16 %v83
    %v193 = vunpack.c.l.b16 %v84
    %v194 = vunpack.c.h.b16 %v84
    %v195 = vunpack.c.l.b16 %v85
    %v196 = vunpack.c.h.b16 %v85
    %v197 = vunpack.c.l.b16 %v86
    %v198 = vunpack.c.h.b16 %v86
    %v199 = vunpack.c.l.b16 %v87
    %v200 = vunpack.c.h.b16 %v87
    %v201 = vunpack.c.l.b16 %v88
    %v202 = vunpack.c.h.b16 %v88
    %v203 = vpack.c.b16 %v143, %v139
    %v204 = vpack.c.b16 %v144, %v140
    %v205 = vpack.c.b16 %v145, %v141
    %v206 = vpack.c.b16 %v146, %v142
    %v207 = vpack.c.b16 %v151, %v147
    %v208 = vpack.c.b16 %v152, %v148
    %v209 = vpack.c.b16 %v153, %v149
    %v210 = vpack.c.b16 %v154, %v150
    %v211 = vpack.c.b16 %v159, %v155
    %v212 = vpack.c.b16 %v160, %v156
    %v213 = vpack.c.b16 %v161, %v157
    %v214 = vpack.c.b16 %v162, %v158
    %v215 = vpack.c.b16 %v167, %v163
    %v216 = vpack.c.b16 %v168, %v164
    %v217 = vpack.c.b16 %v169, %v165
    %v218 = vpack.c.b16 %v170, %v166
    %v219 = vpack.c.b16 %v175, %v171
    %v220 = vpack.c.b16 %v176, %v172
    %v221 = vpack.c.b16 %v177, %v173
    %v222 = vpack.c.b16 %v178, %v174
    %v223 = vpack.c.b16 %v183, %v179
    %v224 = vpack.c.b16 %v184, %v180
    %v225 = vpack.c.b16 %v185, %v181
    %v226 = vpack.c.b16 %v186, %v182
    %v227 = vpack.c.b16 %v191, %v187
    %v228 = vpack.c.b16 %v192, %v188
    %v229 = vpack.c.b16 %v193, %v189
    %v230 = vpack.c.b16 %v194, %v190
    %v231 = vpack.c.b16 %v199, %v195
    %v232 = vpack.c.b16 %v200, %v196
    %v233 = vpack.c.b16 %v201, %v197
    %v234 = vpack.c.b16 %v202, %v198
    %267 = vmatprep.subr.bf16.mxu0 %v204
    %268 = vmatpush1.bf16.msra.mxu0 %v203
    %269 = vmatprep.subr.bf16.mxu0 %v208
    %270 = vmatpush1.bf16.msra.mxu0 %v207
    %271 = vmatprep.subr.bf16.mxu0 %v212
    %272 = vmatpush1.bf16.msra.mxu0 %v211
    %273 = vmatprep.subr.bf16.mxu0 %v216
    %274 = vmatpush1.bf16.msra.mxu0 %v215
    %275 = vmatprep.subr.bf16.mxu0 %v220
    %276 = vmatpush1.bf16.msra.mxu0 %v219
    %277 = vmatprep.subr.bf16.mxu0 %v224
    %278 = vmatpush1.bf16.msra.mxu0 %v223
    %279 = vmatprep.subr.bf16.mxu0 %v228
    %280 = vmatpush1.bf16.msra.mxu0 %v227
    %281 = vmatprep.subr.bf16.mxu0 %v232
    %282 = vmatpush1.bf16.msra.mxu0 %v231
    %283 = vmatprep.subr.bf16.mxu0 0
    %284 = vmatpush1.bf16.msra.mxu0 0
    %285 = vmatprep.subr.bf16.mxu0 0
    %286 = vmatpush1.bf16.msra.mxu0 0
    %287 = vmatprep.subr.bf16.mxu0 0
    %288 = vmatpush1.bf16.msra.mxu0 0
    %289 = vmatprep.subr.bf16.mxu0 0
    %290 = vmatpush1.bf16.msra.mxu0 0
    %291 = vmatprep.subr.bf16.mxu0 0
    %292 = vmatpush1.bf16.msra.mxu0 0
    %293 = vmatprep.subr.bf16.mxu0 0
    %294 = vmatpush1.bf16.msra.mxu0 0
    %295 = vmatprep.subr.bf16.mxu0 0
    %296 = vmatpush1.bf16.msra.mxu0 0
    %297 = vmatprep.subr.bf16.mxu0 0
    %298 = vmatpush1.bf16.msra.mxu0 0
    %299 = vmatprep.mubr.bf16.mxu0 0
    %300 = vmatmul.mubr.bf16.gmra.mrb[0].mxu0 %v105
    %v301 = vpop.f32.mrb[0].mxu0
    %v302 = vadd.f32 %v94, %v301
    %v303 = vpop.f32.mrb[0].mxu0
    %v304 = vadd.f32 %v94, %v303
    %v305 = vpop.f32.mrb[0].mxu0
    %v306 = vadd.f32 %v99, %v305
    %v307 = vpop.f32.mrb[0].mxu0
    %v308 = vadd.f32 %v99, %v307
    %309 = vdwg.mxu0
    %310 = vmatprep.subr.bf16.mxu0 %v206
    %311 = vmatpush1.bf16.msra.mxu0 %v205
    %312 = vmatprep.subr.bf16.mxu0 %v210
    %313 = vmatpush1.bf16.msra.mxu0 %v209
    %314 = vmatprep.subr.bf16.mxu0 %v214
    %315 = vmatpush1.bf16.msra.mxu0 %v213
    %316 = vmatprep.subr.bf16.mxu0 %v218
    %317 = vmatpush1.bf16.msra.mxu0 %v217
    %318 = vmatprep.subr.bf16.mxu0 %v222
    %319 = vmatpush1.bf16.msra.mxu0 %v221
    %320 = vmatprep.subr.bf16.mxu0 %v226
    %321 = vmatpush1.bf16.msra.mxu0 %v225
    %322 = vmatprep.subr.bf16.mxu0 %v230
    %323 = vmatpush1.bf16.msra.mxu0 %v229
    %324 = vmatprep.subr.bf16.mxu0 %v234
    %325 = vmatpush1.bf16.msra.mxu0 %v233
    %326 = vmatprep.subr.bf16.mxu0 0
    %327 = vmatpush1.bf16.msra.mxu0 0
    %328 = vmatprep.subr.bf16.mxu0 0
    %329 = vmatpush1.bf16.msra.mxu0 0
    %330 = vmatprep.subr.bf16.mxu0 0
    %331 = vmatpush1.bf16.msra.mxu0 0
    %332 = vmatprep.subr.bf16.mxu0 0
    %333 = vmatpush1.bf16.msra.mxu0 0
    %334 = vmatprep.subr.bf16.mxu0 0
    %335 = vmatpush1.bf16.msra.mxu0 0
    %336 = vmatprep.subr.bf16.mxu0 0
    %337 = vmatpush1.bf16.msra.mxu0 0
    %338 = vmatprep.subr.bf16.mxu0 0
    %339 = vmatpush1.bf16.msra.mxu0 0
    %340 = vmatprep.subr.bf16.mxu0 0
    %341 = vmatpush1.bf16.msra.mxu0 0
    %342 = vmatprep.mubr.bf16.mxu0 0
    %343 = vmatmul.mubr.bf16.gmra.mrb[0].mxu0 %v105
    %v344 = vpop.f32.mrb[0].mxu0
    %v345 = vadd.f32 %v94, %v344
    %v346 = vpop.f32.mrb[0].mxu0
    %v347 = vadd.f32 %v94, %v346
    %v348 = vpop.f32.mrb[0].mxu0
    %v349 = vadd.f32 %v99, %v348
    %v350 = vpop.f32.mrb[0].mxu0
    %v351 = vadd.f32 %v99, %v350
    %352 = vdwg.mxu0
    %v353 = vxor.u32 %v306, 2147483648
    %v354 = vxor.u32 %v308, 2147483648
    %v355 = vxor.u32 %v349, 2147483648
    %v356 = vxor.u32 %v351, 2147483648
    %v357 = vmul.f32 %v353, 1.442695
    %v358 = vpow.pop %v357
    %v359 = vmul.f32 %v354, 1.442695
    %v360 = vpow.pop %v359
    %v361 = vmul.f32 %v355, 1.442695
    %v362 = vpow.pop %v361
    %v363 = vmul.f32 %v356, 1.442695
    %v364 = vpow.pop %v363
    %v365 = vadd.f32 %v358, 1.0
    %v366 = vadd.f32 %v360, 1.0
    %v367 = vadd.f32 %v362, 1.0
    %v368 = vadd.f32 %v364, 1.0
    %v369 = vrcp.pop %v365
    %v370 = vmul.f32 1.0, %v369
    %v371 = vrcp.pop %v366
    %v372 = vmul.f32 1.0, %v371
    %v373 = vrcp.pop %v367
    %v374 = vmul.f32 1.0, %v373
    %v375 = vrcp.pop %v368
    %v376 = vmul.f32 1.0, %v375
    %v377 = vmul.f32 %v302, %v370
    %v378 = vmul.f32 %v304, %v372
    %v379 = vmul.f32 %v345, %v374
    %v380 = vmul.f32 %v347, %v376
    %s381 = sld [smem:[#allocation2]]
    %s382 = sld [smem:[#allocation2 + $0x1]]
    %s383 = sld [smem:[#allocation2 + $0x2]]
    %s384 = sld [smem:[#allocation4]]
    %s385 = sld [smem:[#allocation4 + $0x1]]
    %s386 = sld [smem:[#allocation4 + $0x2]]
    %v387 = vadd.f32 %v377, %v378
    %388 = vadd.xlane.f32.xlu0 %v387
    %v389 = vpop.xlane.xlu0 %388
    %v390 = vrcp.pop 256.0
    %v391 = vmul.f32 %v389, %v390
    %v392 = vsub.f32 %v377, %v391
    %v393 = vsub.f32 %v378, %v391
    %v394 = vmul.f32 %v392, %v392
    %v395 = vmul.f32 %v393, %v393
    %v396 = vadd.f32 %v394, %v395
    %397 = vadd.xlane.f32.xlu0 %v396
    %v398 = vpop.xlane.xlu0 %397
    %v399 = vmul.f32 %v398, 0.003921569
    %v400 = vmul.f32 %v391, %v391
    %v401 = vadd.f32 %v399, %v400
    %v402 = vadd.f32 %v379, %v380
    %403 = vadd.xlane.f32.xlu0 %v402
    %v404 = vpop.xlane.xlu0 %403
    %v405 = vmul.f32 %v404, %v390
    %v406 = vsub.f32 %v379, %v405
    %v407 = vsub.f32 %v380, %v405
    %v408 = vmul.f32 %v406, %v406
    %v409 = vmul.f32 %v407, %v407
    %v410 = vadd.f32 %v408, %v409
    %411 = vadd.xlane.f32.xlu0 %v410
    %v412 = vpop.xlane.xlu0 %411
    %v413 = vmul.f32 %v412, 0.003921569
    %v414 = vmul.f32 %v405, %v405
    %v415 = vadd.f32 %v413, %v414
    %v416 = vadd.f32 %v391, 0.0
    %v417 = vadd.f32 %v416, %v405
    %v418 = vmul.f32 %v417, 0.5
    %v419 = vadd.f32 %v401, 0.0
    %v420 = vadd.f32 %v419, %v415
    %v421 = vmul.f32 %v420, 0.5
    %v422 = vmul.f32 %v418, %v418
    %v423 = vsub.f32 %v421, %v422
    %v424 = vld [vmem:[%s4] sm:$0xff]
    %v425 = vld [vmem:[%s5] sm:$0xff]
    %vm426 = vcmask 7168
    %v427 = vsel %vm426, %v391, 0.0
    %428 = vadd.xlane.f32.xlu0 %v427
    %v429 = vpop.xlane.xlu0 %428
    %v430 = vrot.slane %v429, 4
    %v431 = vadd.f32 %v429, %v430
    %v432 = vrot.slane %v431, 2
    %v433 = vadd.f32 %v431, %v432
    %v434 = vrot.slane %v433, 1
    %v435 = vadd.f32 %v433, %v434
    %s436 = vtos %v435
    %s437 = smul.f32 %s436, 0.25
    %v438 = vsel %vm426, %v401, 0.0
    %439 = vadd.xlane.f32.xlu0 %v438
    %v440 = vpop.xlane.xlu0 %439
    %v441 = vrot.slane %v440, 4
    %v442 = vadd.f32 %v440, %v441
    %v443 = vrot.slane %v442, 2
    %v444 = vadd.f32 %v442, %v443
    %v445 = vrot.slane %v444, 1
    %v446 = vadd.f32 %v444, %v445
    %s447 = vtos %v446
    %s448 = smul.f32 %s447, 0.25
    %s449 = smul.f32 %s437, %s437
    %s450 = ssub.f32 %s448, %s449
    %v451 = vstv %s381
    %v452 = vmul.f32 %v451, %v391
    %s453 = smul.f32 %s382, %s437
    %v454 = vstv %s453
    %v455 = vadd.f32 %v452, %v454
    %v456 = vstv %s383
    %v457 = vmul.f32 %v456, %v418
    %v458 = vadd.f32 %v455, %v457
    %v459 = vstv %s384
    %v460 = vmul.f32 %v459, %v399
    %s461 = smul.f32 %s385, %s450
    %v462 = vstv %s461
    %v463 = vadd.f32 %v460, %v462
    %v464 = vstv %s386
    %v465 = vmul.f32 %v464, %v423
    %v466 = vadd.f32 %v463, %v465
    %v467 = vadd.f32 %v466, 1e-05
    %v468 = vrsqrt.pop %v467
    %v469 = vmul.f32 %v424, %v468
    %v470 = vmul.f32 %v458, %v469
    %v471 = vsub.f32 %v425, %v470
    %v472 = vld [vmem:[%s3] sm:$0xff]
    %v473 = vld [vmem:[%s3 + $0x8] sm:$0xff]
    %475 = vset.pattern.permute.xlu0 0
    %476 = vperm.xlu0 %475, %v469
    %v477 = vpop.permute.xlu0 %476
    %v479 = vmul.f32 %v377, %v477
    %v480 = vmul.f32 %v378, %v477
    %v481 = vadd.f32 %v472, %v479
    %v482 = vadd.f32 %v473, %v480
    %484 = vset.pattern.permute.xlu0 0
    %485 = vperm.xlu0 %484, %v471
    %v486 = vpop.permute.xlu0 %485
    %v488 = vadd.f32 %v481, %v486
    %v489 = vadd.f32 %v482, %v486
    %490 = vst [vmem:[%s8] sm:$0xff] %v488
    %491 = vst [vmem:[%s8 + $0x8] sm:$0xff] %v489
    %v492 = vsel %vm426, %v405, 0.0
    %493 = vadd.xlane.f32.xlu0 %v492
    %v494 = vpop.xlane.xlu0 %493
    %v495 = vrot.slane %v494, 4
    %v496 = vadd.f32 %v494, %v495
    %v497 = vrot.slane %v496, 2
    %v498 = vadd.f32 %v496, %v497
    %v499 = vrot.slane %v498, 1
    %v500 = vadd.f32 %v498, %v499
    %s501 = vtos %v500
    %s502 = smul.f32 %s501, 0.25
    %v503 = vsel %vm426, %v415, 0.0
    %504 = vadd.xlane.f32.xlu0 %v503
    %v505 = vpop.xlane.xlu0 %504
    %v506 = vrot.slane %v505, 4
    %v507 = vadd.f32 %v505, %v506
    %v508 = vrot.slane %v507, 2
    %v509 = vadd.f32 %v507, %v508
    %v510 = vrot.slane %v509, 1
    %v511 = vadd.f32 %v509, %v510
    %s512 = vtos %v511
    %s513 = smul.f32 %s512, 0.25
    %s514 = smul.f32 %s502, %s502
    %s515 = ssub.f32 %s513, %s514
    %v516 = vmul.f32 %v451, %v405
    %s517 = smul.f32 %s382, %s502
    %v518 = vstv %s517
    %v519 = vadd.f32 %v516, %v518
    %v520 = vadd.f32 %v519, %v457
    %v521 = vmul.f32 %v459, %v413
    %s522 = smul.f32 %s385, %s515
    %v523 = vstv %s522
    %v524 = vadd.f32 %v521, %v523
    %v525 = vadd.f32 %v524, %v465
    %v526 = vadd.f32 %v525, 1e-05
    %v527 = vrsqrt.pop %v526
    %v528 = vmul.f32 %v424, %v527
    %v529 = vmul.f32 %v520, %v528
    %v530 = vsub.f32 %v425, %v529
    %v531 = vld [vmem:[%s3 + $0x10] sm:$0xff]
    %v532 = vld [vmem:[%s3 + $0x18] sm:$0xff]
    %534 = vset.pattern.permute.xlu0 0
    %535 = vperm.xlu0 %534, %v528
    %v536 = vpop.permute.xlu0 %535
    %v538 = vmul.f32 %v379, %v536
    %v539 = vmul.f32 %v380, %v536
    %v540 = vadd.f32 %v531, %v538
    %v541 = vadd.f32 %v532, %v539
    %543 = vset.pattern.permute.xlu0 0
    %544 = vperm.xlu0 %543, %v530
    %v545 = vpop.permute.xlu0 %544
    %v547 = vadd.f32 %v540, %v545
    %v548 = vadd.f32 %v541, %v545
    %549 = vst [vmem:[%s8 + $0x10] sm:$0xff] %v547
    %550 = vst [vmem:[%s8 + $0x18] sm:$0xff] %v548
    // Predicated region
    $region42: #{covd_forward.2} parent=1 // pred_check
      _
    $region43: #{covd_forward.2} parent=1 // pred_check_branch
      %552 = sbr.rel (0) target = $region45
    $region44: #{covd_forward.2} parent=1 // pred_region
      _
    $region45: #{covd_forward.2} parent=1 // pred_fallthru
      _
    // Predicated region
    $region46: #{covd_forward.2} parent=1 // pred_check
      _
    $region47: #{covd_forward.2} parent=1 // pred_check_branch
      %554 = sbr.rel (0) target = $region49
    $region48: #{covd_forward.2} parent=1 // pred_region
      _
    $region49: #{covd_forward.2} parent=1 // pred_fallthru
      _
    %555 = vsyncpa [#allocation3], 1
    %556 = vsyncpa [#allocation5], 1

// kernel: covd_forward.3
$region0: #{covd_forward.3}
  #allocation0 [shape = 'u32[]', space=smem, size = 0x4, offset = 0x4, fixed_abs, tag = 'smem constant byte address 0x4 - core index']
  #allocation1 [shape = 'u32[144,128]{1,0:T(1,128)}', space=vmem, size = 0x12000, scoped, tag = 'internal scratch']
  %s0 = inlined_call_operand.vmem [shape: bf16[256,512], index: 0, kind: input, shape index: {}]
  %s1 = inlined_call_operand.vmem [shape: bf16[16,256], index: 1, kind: input, shape index: {}]
  %s2 = inlined_call_operand.vmem [shape: f32[16,1], index: 2, kind: input, shape index: {}]
  %s3 = inlined_call_operand.vmem [shape: f32[8,512], index: 3, kind: input, shape index: {}]
  %s4 = inlined_call_operand.vmem [shape: f32[8,1], index: 4, kind: input, shape index: {}]
  %s5 = inlined_call_operand.vmem [shape: f32[8,1], index: 5, kind: input, shape index: {}]
  %s6 = inlined_call_operand.vmem [shape: f32[3], index: 6, kind: input, shape index: {}]
  %s7 = inlined_call_operand.vmem [shape: f32[3], index: 7, kind: input, shape index: {}]
  %s8 = inlined_call_operand.vmem [shape: f32[8,512], index: 8, kind: output, shape index: {}]
  %s9 = sld [smem:[#allocation0]]
  $region50: #{covd_forward.3} parent=0
    _
  %s11 = ssub.s32 1, %s9
  %s12 = scalar_select 0, %s11, %s9
  $region1: #{covd_forward.3} parent=0
    #allocation2 [shape = 'u8[512]{0}', space=smem, size = 0x200, scoped, tag = 'input window, operand 6, single buffered']
    #allocation3 [shape = 's32[1]{0}', space=sflag, size = 0x4, scoped, tag = 'scoped memory for covd_forward.3']
    #allocation4 [shape = 'u8[512]{0}', space=smem, size = 0x200, scoped, tag = 'input window, operand 7, single buffered']
    #allocation5 [shape = 's32[1]{0}', space=sflag, size = 0x4, scoped, tag = 'scoped memory for covd_forward.3']
    %13 = vsyncpa [#allocation3], 0
    %14 = vsyncpa [#allocation5], 0
    // Predicated region
    $region2: #{covd_forward.3} parent=1 // pred_check
      _
    $region3: #{covd_forward.3} parent=1 // pred_check_branch
      %16 = sbr.rel (0) target = $region5
    $region4: #{covd_forward.3} parent=1 // pred_region
      _
    $region5: #{covd_forward.3} parent=1 // pred_fallthru
      _
    // Predicated region
    $region6: #{covd_forward.3} parent=1 // pred_check
      _
    $region7: #{covd_forward.3} parent=1 // pred_check_branch
      %18 = sbr.rel (0) target = $region9
    $region8: #{covd_forward.3} parent=1 // pred_region
      _
    $region9: #{covd_forward.3} parent=1 // pred_fallthru
      _
    // Predicated region
    $region10: #{covd_forward.3} parent=1 // pred_check
      _
    $region11: #{covd_forward.3} parent=1 // pred_check_branch
      %20 = sbr.rel (0) target = $region13
    $region12: #{covd_forward.3} parent=1 // pred_region
      _
    $region13: #{covd_forward.3} parent=1 // pred_fallthru
      _
    // Predicated region
    $region14: #{covd_forward.3} parent=1 // pred_check
      _
    $region15: #{covd_forward.3} parent=1 // pred_check_branch
      %22 = sbr.rel (0) target = $region17
    $region16: #{covd_forward.3} parent=1 // pred_region
      _
    $region17: #{covd_forward.3} parent=1 // pred_fallthru
      _
    // Predicated region
    $region18: #{covd_forward.3} parent=1 // pred_check
      _
    $region19: #{covd_forward.3} parent=1 // pred_check_branch
      %24 = sbr.rel (0) target = $region21
    $region20: #{covd_forward.3} parent=1 // pred_region
      _
    $region21: #{covd_forward.3} parent=1 // pred_fallthru
      _
    // Predicated region
    $region22: #{covd_forward.3} parent=1 // pred_check
      _
    $region23: #{covd_forward.3} parent=1 // pred_check_branch
      %26 = sbr.rel (0) target = $region25
    $region24: #{covd_forward.3} parent=1 // pred_region
      _
    $region25: #{covd_forward.3} parent=1 // pred_fallthru
      _
    // Predicated region
    $region26: #{covd_forward.3} parent=1 // pred_check
      _
    $region27: #{covd_forward.3} parent=1 // pred_check_branch
      %28 = sbr.rel (0) target = $region29
    $region28: #{covd_forward.3} parent=1 // pred_region
      %s30 = ssub.s32 16, 16
      %31 = vsyncadd [#allocation3], %s30
      %s33 = sshll.u32 %s6, 4
      %s34 = int_to_ptr.vmem [resolvable:$true] %s33
      %36 = dma.vmem_to_smem %s34, 16, [#allocation2], [#allocation3]
    $region29: #{covd_forward.3} parent=1 // pred_fallthru
      _
    // Predicated region
    $region30: #{covd_forward.3} parent=1 // pred_check
      _
    $region31: #{covd_forward.3} parent=1 // pred_check_branch
      %38 = sbr.rel (0) target = $region33
    $region32: #{covd_forward.3} parent=1 // pred_region
      %s40 = ssub.s32 16, 16
      %41 = vsyncadd [#allocation5], %s40
      %s43 = sshll.u32 %s7, 4
      %s44 = int_to_ptr.vmem [resolvable:$true] %s43
      %46 = dma.vmem_to_smem %s44, 16, [#allocation4], [#allocation5]
    $region33: #{covd_forward.3} parent=1 // pred_fallthru
      _
    // Predicated region
    $region34: #{covd_forward.3} parent=1 // pred_check
      _
    $region35: #{covd_forward.3} parent=1 // pred_check_branch
      %48 = sbr.rel (0) target = $region37
    $region36: #{covd_forward.3} parent=1 // pred_region
      %49 = dma.done [#allocation3], 16
    $region37: #{covd_forward.3} parent=1 // pred_fallthru
      _
    // Predicated region
    $region38: #{covd_forward.3} parent=1 // pred_check
      _
    $region39: #{covd_forward.3} parent=1 // pred_check_branch
      %51 = sbr.rel (0) target = $region41
    $region40: #{covd_forward.3} parent=1 // pred_region
      %52 = dma.done [#allocation5], 16
    $region41: #{covd_forward.3} parent=1 // pred_fallthru
      _
    %53 = sfence
    %v54 = vld [vmem:[%s1] sm:$0xff]
    %v55 = vld [vmem:[%s1 + $0x8] sm:$0xff]
    %v56 = vld [vmem:[%s0] sm:$0xff]
    %v57 = vld [vmem:[%s0 + $0x8] sm:$0xff]
    %v58 = vld [vmem:[%s0 + $0x10] sm:$0xff]
    %v59 = vld [vmem:[%s0 + $0x18] sm:$0xff]
    %v60 = vld [vmem:[%s0 + $0x20] sm:$0xff]
    %v61 = vld [vmem:[%s0 + $0x28] sm:$0xff]
    %v62 = vld [vmem:[%s0 + $0x30] sm:$0xff]
    %v63 = vld [vmem:[%s0 + $0x38] sm:$0xff]
    %v64 = vld [vmem:[%s0 + $0x40] sm:$0xff]
    %v65 = vld [vmem:[%s0 + $0x48] sm:$0xff]
    %v66 = vld [vmem:[%s0 + $0x50] sm:$0xff]
    %v67 = vld [vmem:[%s0 + $0x58] sm:$0xff]
    %v68 = vld [vmem:[%s0 + $0x60] sm:$0xff]
    %v69 = vld [vmem:[%s0 + $0x68] sm:$0xff]
    %v70 = vld [vmem:[%s0 + $0x70] sm:$0xff]
    %v71 = vld [vmem:[%s0 + $0x78] sm:$0xff]
    %v72 = vld [vmem:[%s0 + $0x80] sm:$0xff]
    %v73 = vld [vmem:[%s0 + $0x88] sm:$0xff]
    %v74 = vld [vmem:[%s0 + $0x90] sm:$0xff]
    %v75 = vld [vmem:[%s0 + $0x98] sm:$0xff]
    %v76 = vld [vmem:[%s0 + $0xa0] sm:$0xff]
    %v77 = vld [vmem:[%s0 + $0xa8] sm:$0xff]
    %v78 = vld [vmem:[%s0 + $0xb0] sm:$0xff]
    %v79 = vld [vmem:[%s0 + $0xb8] sm:$0xff]
    %v80 = vld [vmem:[%s0 + $0xc0] sm:$0xff]
    %v81 = vld [vmem:[%s0 + $0xc8] sm:$0xff]
    %v82 = vld [vmem:[%s0 + $0xd0] sm:$0xff]
    %v83 = vld [vmem:[%s0 + $0xd8] sm:$0xff]
    %v84 = vld [vmem:[%s0 + $0xe0] sm:$0xff]
    %v85 = vld [vmem:[%s0 + $0xe8] sm:$0xff]
    %v86 = vld [vmem:[%s0 + $0xf0] sm:$0xff]
    %v87 = vld [vmem:[%s0 + $0xf8] sm:$0xff]
    %v88 = vld [vmem:[%s0 + $0x100] sm:$0xff]
    %v89 = vld [vmem:[%s0 + $0x108] sm:$0xff]
    %v90 = vld [vmem:[%s0 + $0x110] sm:$0xff]
    %v91 = vld [vmem:[%s0 + $0x118] sm:$0xff]
    %v92 = vld [vmem:[%s0 + $0x120] sm:$0xff]
    %v93 = vld [vmem:[%s0 + $0x128] sm:$0xff]
    %v94 = vld [vmem:[%s0 + $0x130] sm:$0xff]
    %v95 = vld [vmem:[%s0 + $0x138] sm:$0xff]
    %v96 = vld [vmem:[%s0 + $0x140] sm:$0xff]
    %v97 = vld [vmem:[%s0 + $0x148] sm:$0xff]
    %v98 = vld [vmem:[%s0 + $0x150] sm:$0xff]
    %v99 = vld [vmem:[%s0 + $0x158] sm:$0xff]
    %v100 = vld [vmem:[%s0 + $0x160] sm:$0xff]
    %v101 = vld [vmem:[%s0 + $0x168] sm:$0xff]
    %v102 = vld [vmem:[%s0 + $0x170] sm:$0xff]
    %v103 = vld [vmem:[%s0 + $0x178] sm:$0xff]
    %v104 = vld [vmem:[%s0 + $0x180] sm:$0xff]
    %v105 = vld [vmem:[%s0 + $0x188] sm:$0xff]
    %v106 = vld [vmem:[%s0 + $0x190] sm:$0xff]
    %v107 = vld [vmem:[%s0 + $0x198] sm:$0xff]
    %v108 = vld [vmem:[%s0 + $0x1a0] sm:$0xff]
    %v109 = vld [vmem:[%s0 + $0x1a8] sm:$0xff]
    %v110 = vld [vmem:[%s0 + $0x1b0] sm:$0xff]
    %v111 = vld [vmem:[%s0 + $0x1b8] sm:$0xff]
    %v112 = vld [vmem:[%s0 + $0x1c0] sm:$0xff]
    %v113 = vld [vmem:[%s0 + $0x1c8] sm:$0xff]
    %v114 = vld [vmem:[%s0 + $0x1d0] sm:$0xff]
    %v115 = vld [vmem:[%s0 + $0x1d8] sm:$0xff]
    %v116 = vld [vmem:[%s0 + $0x1e0] sm:$0xff]
    %v117 = vld [vmem:[%s0 + $0x1e8] sm:$0xff]
    %v118 = vld [vmem:[%s0 + $0x1f0] sm:$0xff]
    %v119 = vld [vmem:[%s0 + $0x1f8] sm:$0xff]
    %v120 = vld [vmem:[%s2] sm:$0xff]
    %v121 = vld [vmem:[%s2 + $0x8] sm:$0xff]
    %123 = vset.pattern.permute.xlu0 0
    %124 = vperm.xlu0 %123, %v120
    %v125 = vpop.permute.xlu0 %124
    %128 = vset.pattern.permute.xlu0 0
    %129 = vperm.xlu0 %128, %v121
    %v130 = vpop.permute.xlu0 %129
    %v134 = vunpack.c.l.b16 %v54
    %v135 = vunpack.c.h.b16 %v54
    %v136 = vunpack.c.l.b16 %v55
    %v137 = vunpack.c.h.b16 %v55
    %v138 = vpack.c.b16 %v136, %v134
    %v139 = vpack.c.b16 %v137, %v135
    %v206 = vunpack.c.l.b16 %v56
    %v207 = vunpack.c.h.b16 %v56
    %v208 = vunpack.c.l.b16 %v57
    %v209 = vunpack.c.h.b16 %v57
    %v210 = vunpack.c.l.b16 %v58
    %v211 = vunpack.c.h.b16 %v58
    %v212 = vunpack.c.l.b16 %v59
    %v213 = vunpack.c.h.b16 %v59
    %v214 = vunpack.c.l.b16 %v60
    %v215 = vunpack.c.h.b16 %v60
    %v216 = vunpack.c.l.b16 %v61
    %v217 = vunpack.c.h.b16 %v61
    %v218 = vunpack.c.l.b16 %v62
    %v219 = vunpack.c.h.b16 %v62
    %v220 = vunpack.c.l.b16 %v63
    %v221 = vunpack.c.h.b16 %v63
    %v222 = vunpack.c.l.b16 %v64
    %v223 = vunpack.c.h.b16 %v64
    %v224 = vunpack.c.l.b16 %v65
    %v225 = vunpack.c.h.b16 %v65
    %v226 = vunpack.c.l.b16 %v66
    %v227 = vunpack.c.h.b16 %v66
    %v228 = vunpack.c.l.b16 %v67
    %v229 = vunpack.c.h.b16 %v67
    %v230 = vunpack.c.l.b16 %v68
    %v231 = vunpack.c.h.b16 %v68
    %v232 = vunpack.c.l.b16 %v69
    %v233 = vunpack.c.h.b16 %v69
    %v234 = vunpack.c.l.b16 %v70
    %v235 = vunpack.c.h.b16 %v70
    %v236 = vunpack.c.l.b16 %v71
    %v237 = vunpack.c.h.b16 %v71
    %v238 = vunpack.c.l.b16 %v72
    %v239 = vunpack.c.h.b16 %v72
    %v240 = vunpack.c.l.b16 %v73
    %v241 = vunpack.c.h.b16 %v73
    %v242 = vunpack.c.l.b16 %v74
    %v243 = vunpack.c.h.b16 %v74
    %v244 = vunpack.c.l.b16 %v75
    %v245 = vunpack.c.h.b16 %v75
    %v246 = vunpack.c.l.b16 %v76
    %v247 = vunpack.c.h.b16 %v76
    %v248 = vunpack.c.l.b16 %v77
    %v249 = vunpack.c.h.b16 %v77
    %v250 = vunpack.c.l.b16 %v78
    %v251 = vunpack.c.h.b16 %v78
    %v252 = vunpack.c.l.b16 %v79
    %v253 = vunpack.c.h.b16 %v79
    %v254 = vunpack.c.l.b16 %v80
    %v255 = vunpack.c.h.b16 %v80
    %v256 = vunpack.c.l.b16 %v81
    %v257 = vunpack.c.h.b16 %v81
    %v258 = vunpack.c.l.b16 %v82
    %v259 = vunpack.c.h.b16 %v82
    %v260 = vunpack.c.l.b16 %v83
    %v261 = vunpack.c.h.b16 %v83
    %v262 = vunpack.c.l.b16 %v84
    %v263 = vunpack.c.h.b16 %v84
    %v264 = vunpack.c.l.b16 %v85
    %v265 = vunpack.c.h.b16 %v85
    %v266 = vunpack.c.l.b16 %v86
    %v267 = vunpack.c.h.b16 %v86
    %v268 = vunpack.c.l.b16 %v87
    %v269 = vunpack.c.h.b16 %v87
    %v270 = vunpack.c.l.b16 %v88
    %v271 = vunpack.c.h.b16 %v88
    %v272 = vunpack.c.l.b16 %v89
    %v273 = vunpack.c.h.b16 %v89
    %v274 = vunpack.c.l.b16 %v90
    %v275 = vunpack.c.h.b16 %v90
    %v276 = vunpack.c.l.b16 %v91
    %v277 = vunpack.c.h.b16 %v91
    %v278 = vunpack.c.l.b16 %v92
    %v279 = vunpack.c.h.b16 %v92
    %v280 = vunpack.c.l.b16 %v93
    %v281 = vunpack.c.h.b16 %v93
    %v282 = vunpack.c.l.b16 %v94
    %v283 = vunpack.c.h.b16 %v94
    %v284 = vunpack.c.l.b16 %v95
    %v285 = vunpack.c.h.b16 %v95
    %v286 = vunpack.c.l.b16 %v96
    %v287 = vunpack.c.h.b16 %v96
    %v288 = vunpack.c.l.b16 %v97
    %v289 = vunpack.c.h.b16 %v97
    %v290 = vunpack.c.l.b16 %v98
    %v291 = vunpack.c.h.b16 %v98
    %v292 = vunpack.c.l.b16 %v99
    %v293 = vunpack.c.h.b16 %v99
    %v294 = vunpack.c.l.b16 %v100
    %v295 = vunpack.c.h.b16 %v100
    %v296 = vunpack.c.l.b16 %v101
    %v297 = vunpack.c.h.b16 %v101
    %v298 = vunpack.c.l.b16 %v102
    %v299 = vunpack.c.h.b16 %v102
    %v300 = vunpack.c.l.b16 %v103
    %v301 = vunpack.c.h.b16 %v103
    %v302 = vunpack.c.l.b16 %v104
    %v303 = vunpack.c.h.b16 %v104
    %v304 = vunpack.c.l.b16 %v105
    %v305 = vunpack.c.h.b16 %v105
    %v306 = vunpack.c.l.b16 %v106
    %v307 = vunpack.c.h.b16 %v106
    %v308 = vunpack.c.l.b16 %v107
    %v309 = vunpack.c.h.b16 %v107
    %v310 = vunpack.c.l.b16 %v108
    %v311 = vunpack.c.h.b16 %v108
    %v312 = vunpack.c.l.b16 %v109
    %v313 = vunpack.c.h.b16 %v109
    %v314 = vunpack.c.l.b16 %v110
    %v315 = vunpack.c.h.b16 %v110
    %v316 = vunpack.c.l.b16 %v111
    %v317 = vunpack.c.h.b16 %v111
    %v318 = vunpack.c.l.b16 %v112
    %v319 = vunpack.c.h.b16 %v112
    %v320 = vunpack.c.l.b16 %v113
    %v321 = vunpack.c.h.b16 %v113
    %v322 = vunpack.c.l.b16 %v114
    %v323 = vunpack.c.h.b16 %v114
    %v324 = vunpack.c.l.b16 %v115
    %v325 = vunpack.c.h.b16 %v115
    %v326 = vunpack.c.l.b16 %v116
    %v327 = vunpack.c.h.b16 %v116
    %v328 = vunpack.c.l.b16 %v117
    %v329 = vunpack.c.h.b16 %v117
    %v330 = vunpack.c.l.b16 %v118
    %v331 = vunpack.c.h.b16 %v118
    %v332 = vunpack.c.l.b16 %v119
    %v333 = vunpack.c.h.b16 %v119
    %v334 = vpack.c.b16 %v210, %v206
    %v335 = vpack.c.b16 %v211, %v207
    %v336 = vpack.c.b16 %v212, %v208
    %v337 = vpack.c.b16 %v213, %v209
    %v338 = vpack.c.b16 %v218, %v214
    %v339 = vpack.c.b16 %v219, %v215
    %v340 = vpack.c.b16 %v220, %v216
    %v341 = vpack.c.b16 %v221, %v217
    %v342 = vpack.c.b16 %v226, %v222
    %v343 = vpack.c.b16 %v227, %v223
    %v344 = vpack.c.b16 %v228, %v224
    %v345 = vpack.c.b16 %v229, %v225
    %v346 = vpack.c.b16 %v234, %v230
    %v347 = vpack.c.b16 %v235, %v231
    %v348 = vpack.c.b16 %v236, %v232
    %v349 = vpack.c.b16 %v237, %v233
    %v350 = vpack.c.b16 %v242, %v238
    %v351 = vpack.c.b16 %v243, %v239
    %v352 = vpack.c.b16 %v244, %v240
    %v353 = vpack.c.b16 %v245, %v241
    %v354 = vpack.c.b16 %v250, %v246
    %v355 = vpack.c.b16 %v251, %v247
    %v356 = vpack.c.b16 %v252, %v248
    %v357 = vpack.c.b16 %v253, %v249
    %v358 = vpack.c.b16 %v258, %v254
    %v359 = vpack.c.b16 %v259, %v255
    %v360 = vpack.c.b16 %v260, %v256
    %v361 = vpack.c.b16 %v261, %v257
    %v362 = vpack.c.b16 %v266, %v262
    %v363 = vpack.c.b16 %v267, %v263
    %v364 = vpack.c.b16 %v268, %v264
    %v365 = vpack.c.b16 %v269, %v265
    %v366 = vpack.c.b16 %v274, %v270
    %v367 = vpack.c.b16 %v275, %v271
    %v368 = vpack.c.b16 %v276, %v272
    %v369 = vpack.c.b16 %v277, %v273
    %v370 = vpack.c.b16 %v282, %v278
    %v371 = vpack.c.b16 %v283, %v279
    %v372 = vpack.c.b16 %v284, %v280
    %v373 = vpack.c.b16 %v285, %v281
    %v374 = vpack.c.b16 %v290, %v286
    %v375 = vpack.c.b16 %v291, %v287
    %v376 = vpack.c.b16 %v292, %v288
    %v377 = vpack.c.b16 %v293, %v289
    %v378 = vpack.c.b16 %v298, %v294
    %v379 = vpack.c.b16 %v299, %v295
    %v380 = vpack.c.b16 %v300, %v296
    %v381 = vpack.c.b16 %v301, %v297
    %v382 = vpack.c.b16 %v306, %v302
    %v383 = vpack.c.b16 %v307, %v303
    %v384 = vpack.c.b16 %v308, %v304
    %v385 = vpack.c.b16 %v309, %v305
    %v386 = vpack.c.b16 %v314, %v310
    %v387 = vpack.c.b16 %v315, %v311
    %v388 = vpack.c.b16 %v316, %v312
    %v389 = vpack.c.b16 %v317, %v313
    %v390 = vpack.c.b16 %v322, %v318
    %v391 = vpack.c.b16 %v323, %v319
    %v392 = vpack.c.b16 %v324, %v320
    %v393 = vpack.c.b16 %v325, %v321
    %v394 = vpack.c.b16 %v330, %v326
    %v395 = vpack.c.b16 %v331, %v327
    %v396 = vpack.c.b16 %v332, %v328
    %v397 = vpack.c.b16 %v333, %v329
    %462 = vmatprep.subr.bf16.mxu0 %v335
    %463 = vmatpush1.bf16.msra.mxu0 %v334
    %464 = vmatprep.subr.bf16.mxu0 %v339
    %465 = vmatpush1.bf16.msra.mxu0 %v338
    %466 = vmatprep.subr.bf16.mxu0 %v343
    %467 = vmatpush1.bf16.msra.mxu0 %v342
    %468 = vmatprep.subr.bf16.mxu0 %v347
    %469 = vmatpush1.bf16.msra.mxu0 %v346
    %470 = vmatprep.subr.bf16.mxu0 %v351
    %471 = vmatpush1.bf16.msra.mxu0 %v350
    %472 = vmatprep.subr.bf16.mxu0 %v355
    %473 = vmatpush1.bf16.msra.mxu0 %v354
    %474 = vmatprep.subr.bf16.mxu0 %v359
    %475 = vmatpush1.bf16.msra.mxu0 %v358
    %476 = vmatprep.subr.bf16.mxu0 %v363
    %477 = vmatpush1.bf16.msra.mxu0 %v362
    %478 = vmatprep.subr.bf16.mxu0 %v367
    %479 = vmatpush1.bf16.msra.mxu0 %v366
    %480 = vmatprep.subr.bf16.mxu0 %v371
    %481 = vmatpush1.bf16.msra.mxu0 %v370
    %482 = vmatprep.subr.bf16.mxu0 %v375
    %483 = vmatpush1.bf16.msra.mxu0 %v374
    %484 = vmatprep.subr.bf16.mxu0 %v379
    %485 = vmatpush1.bf16.msra.mxu0 %v378
    %486 = vmatprep.subr.bf16.mxu0 %v383
    %487 = vmatpush1.bf16.msra.mxu0 %v382
    %488 = vmatprep.subr.bf16.mxu0 %v387
    %489 = vmatpush1.bf16.msra.mxu0 %v386
    %490 = vmatprep.subr.bf16.mxu0 %v391
    %491 = vmatpush1.bf16.msra.mxu0 %v390
    %492 = vmatprep.subr.bf16.mxu0 %v395
    %493 = vmatpush1.bf16.msra.mxu0 %v394
    %494 = vmatprep.mubr.bf16.mxu0 %v139
    %495 = vmatmul.mubr.bf16.gmra.mrb[0].mxu0 %v138
    %v496 = vpop.f32.mrb[0].mxu0
    %v497 = vadd.f32 %v125, %v496
    %v498 = vpop.f32.mrb[0].mxu0
    %v499 = vadd.f32 %v125, %v498
    %v500 = vpop.f32.mrb[0].mxu0
    %v501 = vadd.f32 %v130, %v500
    %v502 = vpop.f32.mrb[0].mxu0
    %v503 = vadd.f32 %v130, %v502
    %504 = vdwg.mxu0
    %505 = vmatprep.subr.bf16.mxu0 %v337
    %506 = vmatpush1.bf16.msra.mxu0 %v336
    %507 = vmatprep.subr.bf16.mxu0 %v341
    %508 = vmatpush1.bf16.msra.mxu0 %v340
    %509 = vmatprep.subr.bf16.mxu0 %v345
    %510 = vmatpush1.bf16.msra.mxu0 %v344
    %511 = vmatprep.subr.bf16.mxu0 %v349
    %512 = vmatpush1.bf16.msra.mxu0 %v348
    %513 = vmatprep.subr.bf16.mxu0 %v353
    %514 = vmatpush1.bf16.msra.mxu0 %v352
    %515 = vmatprep.subr.bf16.mxu0 %v357
    %516 = vmatpush1.bf16.msra.mxu0 %v356
    %517 = vmatprep.subr.bf16.mxu0 %v361
    %518 = vmatpush1.bf16.msra.mxu0 %v360
    %519 = vmatprep.subr.bf16.mxu0 %v365
    %520 = vmatpush1.bf16.msra.mxu0 %v364
    %521 = vmatprep.subr.bf16.mxu0 %v369
    %522 = vmatpush1.bf16.msra.mxu0 %v368
    %523 = vmatprep.subr.bf16.mxu0 %v373
    %524 = vmatpush1.bf16.msra.mxu0 %v372
    %525 = vmatprep.subr.bf16.mxu0 %v377
    %526 = vmatpush1.bf16.msra.mxu0 %v376
    %527 = vmatprep.subr.bf16.mxu0 %v381
    %528 = vmatpush1.bf16.msra.mxu0 %v380
    %529 = vmatprep.subr.bf16.mxu0 %v385
    %530 = vmatpush1.bf16.msra.mxu0 %v384
    %531 = vmatprep.subr.bf16.mxu0 %v389
    %532 = vmatpush1.bf16.msra.mxu0 %v388
    %533 = vmatprep.subr.bf16.mxu0 %v393
    %534 = vmatpush1.bf16.msra.mxu0 %v392
    %535 = vmatprep.subr.bf16.mxu0 %v397
    %536 = vmatpush1.bf16.msra.mxu0 %v396
    %537 = vmatprep.mubr.bf16.mxu0 %v139
    %538 = vmatmul.mubr.bf16.gmra.mrb[0].mxu0 %v138
    %v539 = vpop.f32.mrb[0].mxu0
    %v540 = vadd.f32 %v125, %v539
    %v541 = vpop.f32.mrb[0].mxu0
    %v542 = vadd.f32 %v125, %v541
    %v543 = vpop.f32.mrb[0].mxu0
    %v544 = vadd.f32 %v130, %v543
    %v545 = vpop.f32.mrb[0].mxu0
    %v546 = vadd.f32 %v130, %v545
    %547 = vdwg.mxu0
    %v548 = vxor.u32 %v501, 2147483648
    %v549 = vxor.u32 %v503, 2147483648
    %v550 = vxor.u32 %v544, 2147483648
    %v551 = vxor.u32 %v546, 2147483648
    %v552 = vmul.f32 %v548, 1.442695
    %v553 = vpow.pop %v552
    %v554 = vmul.f32 %v549, 1.442695
    %v555 = vpow.pop %v554
    %v556 = vmul.f32 %v550, 1.442695
    %v557 = vpow.pop %v556
    %v558 = vmul.f32 %v551, 1.442695
    %v559 = vpow.pop %v558
    %v560 = vadd.f32 %v553, 1.0
    %v561 = vadd.f32 %v555, 1.0
    %v562 = vadd.f32 %v557, 1.0
    %v563 = vadd.f32 %v559, 1.0
    %v564 = vrcp.pop %v560
    %v565 = vmul.f32 1.0, %v564
    %v566 = vrcp.pop %v561
    %v567 = vmul.f32 1.0, %v566
    %v568 = vrcp.pop %v562
    %v569 = vmul.f32 1.0, %v568
    %v570 = vrcp.pop %v563
    %v571 = vmul.f32 1.0, %v570
    %v572 = vmul.f32 %v497, %v565
    %v573 = vmul.f32 %v499, %v567
    %v574 = vmul.f32 %v540, %v569
    %v575 = vmul.f32 %v542, %v571
    %s576 = sld [smem:[#allocation2]]
    %s577 = sld [smem:[#allocation2 + $0x1]]
    %s578 = sld [smem:[#allocation2 + $0x2]]
    %s579 = sld [smem:[#allocation4]]
    %s580 = sld [smem:[#allocation4 + $0x1]]
    %s581 = sld [smem:[#allocation4 + $0x2]]
    %v582 = vadd.f32 %v572, %v573
    %583 = vadd.xlane.f32.xlu0 %v582
    %v584 = vpop.xlane.xlu0 %583
    %v585 = vrcp.pop 256.0
    %v586 = vmul.f32 %v584, %v585
    %v587 = vsub.f32 %v572, %v586
    %v588 = vsub.f32 %v573, %v586
    %v589 = vmul.f32 %v587, %v587
    %v590 = vmul.f32 %v588, %v588
    %v591 = vadd.f32 %v589, %v590
    %592 = vadd.xlane.f32.xlu0 %v591
    %v593 = vpop.xlane.xlu0 %592
    %v594 = vmul.f32 %v593, 0.003921569
    %v595 = vmul.f32 %v586, %v586
    %v596 = vadd.f32 %v594, %v595
    %v597 = vadd.f32 %v574, %v575
    %598 = vadd.xlane.f32.xlu0 %v597
    %v599 = vpop.xlane.xlu0 %598
    %v600 = vmul.f32 %v599, %v585
    %v601 = vsub.f32 %v574, %v600
    %v602 = vsub.f32 %v575, %v600
    %v603 = vmul.f32 %v601, %v601
    %v604 = vmul.f32 %v602, %v602
    %v605 = vadd.f32 %v603, %v604
    %606 = vadd.xlane.f32.xlu0 %v605
    %v607 = vpop.xlane.xlu0 %606
    %v608 = vmul.f32 %v607, 0.003921569
    %v609 = vmul.f32 %v600, %v600
    %v610 = vadd.f32 %v608, %v609
    %v611 = vadd.f32 %v586, 0.0
    %v612 = vadd.f32 %v611, %v600
    %v613 = vmul.f32 %v612, 0.5
    %v614 = vadd.f32 %v596, 0.0
    %v615 = vadd.f32 %v614, %v610
    %v616 = vmul.f32 %v615, 0.5
    %v617 = vmul.f32 %v613, %v613
    %v618 = vsub.f32 %v616, %v617
    %v619 = vld [vmem:[%s4] sm:$0xff]
    %v620 = vld [vmem:[%s5] sm:$0xff]
    %vm621 = vcmask 7168
    %v622 = vsel %vm621, %v586, 0.0
    %623 = vadd.xlane.f32.xlu0 %v622
    %v624 = vpop.xlane.xlu0 %623
    %v625 = vrot.slane %v624, 4
    %v626 = vadd.f32 %v624, %v625
    %v627 = vrot.slane %v626, 2
    %v628 = vadd.f32 %v626, %v627
    %v629 = vrot.slane %v628, 1
    %v630 = vadd.f32 %v628, %v629
    %s631 = vtos %v630
    %s632 = smul.f32 %s631, 0.25
    %v633 = vsel %vm621, %v596, 0.0
    %634 = vadd.xlane.f32.xlu0 %v633
    %v635 = vpop.xlane.xlu0 %634
    %v636 = vrot.slane %v635, 4
    %v637 = vadd.f32 %v635, %v636
    %v638 = vrot.slane %v637, 2
    %v639 = vadd.f32 %v637, %v638
    %v640 = vrot.slane %v639, 1
    %v641 = vadd.f32 %v639, %v640
    %s642 = vtos %v641
    %s643 = smul.f32 %s642, 0.25
    %s644 = smul.f32 %s632, %s632
    %s645 = ssub.f32 %s643, %s644
    %v646 = vstv %s576
    %v647 = vmul.f32 %v646, %v586
    %s648 = smul.f32 %s577, %s632
    %v649 = vstv %s648
    %v650 = vadd.f32 %v647, %v649
    %v651 = vstv %s578
    %v652 = vmul.f32 %v651, %v613
    %v653 = vadd.f32 %v650, %v652
    %v654 = vstv %s579
    %v655 = vmul.f32 %v654, %v594
    %s656 = smul.f32 %s580, %s645
    %v657 = vstv %s656
    %v658 = vadd.f32 %v655, %v657
    %v659 = vstv %s581
    %v660 = vmul.f32 %v659, %v618
    %v661 = vadd.f32 %v658, %v660
    %v662 = vadd.f32 %v661, 1e-05
    %v663 = vrsqrt.pop %v662
    %v664 = vmul.f32 %v619, %v663
    %v665 = vmul.f32 %v653, %v664
    %v666 = vsub.f32 %v620, %v665
    %v667 = vld [vmem:[%s3] sm:$0xff]
    %v668 = vld [vmem:[%s3 + $0x8] sm:$0xff]
    %670 = vset.pattern.permute.xlu0 0
    %671 = vperm.xlu0 %670, %v664
    %v672 = vpop.permute.xlu0 %671
    %v674 = vmul.f32 %v572, %v672
    %v675 = vmul.f32 %v573, %v672
    %v676 = vadd.f32 %v667, %v674
    %v677 = vadd.f32 %v668, %v675
    %679 = vset.pattern.permute.xlu0 0
    %680 = vperm.xlu0 %679, %v666
    %v681 = vpop.permute.xlu0 %680
    %v683 = vadd.f32 %v676, %v681
    %v684 = vadd.f32 %v677, %v681
    %685 = vst [vmem:[%s8] sm:$0xff] %v683
    %686 = vst [vmem:[%s8 + $0x8] sm:$0xff] %v684
    %v687 = vsel %vm621, %v600, 0.0
    %688 = vadd.xlane.f32.xlu0 %v687
    %v689 = vpop.xlane.xlu0 %688
    %v690 = vrot.slane %v689, 4
    %v691 = vadd.f32 %v689, %v690
    %v692 = vrot.slane %v691, 2
    %v693 = vadd.f32 %v691, %v692
    %v694 = vrot.slane %v693, 1
    %v695 = vadd.f32 %v693, %v694
    %s696 = vtos %v695
    %s697 = smul.f32 %s696, 0.25
    %v698 = vsel %vm621, %v610, 0.0
    %699 = vadd.xlane.f32.xlu0 %v698
    %v700 = vpop.xlane.xlu0 %699
    %v701 = vrot.slane %v700, 4
    %v702 = vadd.f32 %v700, %v701
    %v703 = vrot.slane %v702, 2
    %v704 = vadd.f32 %v702, %v703
    %v705 = vrot.slane %v704, 1
    %v706 = vadd.f32 %v704, %v705
    %s707 = vtos %v706
    %s708 = smul.f32 %s707, 0.25
    %s709 = smul.f32 %s697, %s697
    %s710 = ssub.f32 %s708, %s709
    %v711 = vmul.f32 %v646, %v600
    %s712 = smul.f32 %s577, %s697
    %v713 = vstv %s712
    %v714 = vadd.f32 %v711, %v713
    %v715 = vadd.f32 %v714, %v652
    %v716 = vmul.f32 %v654, %v608
    %s717 = smul.f32 %s580, %s710
    %v718 = vstv %s717
    %v719 = vadd.f32 %v716, %v718
    %v720 = vadd.f32 %v719, %v660
    %v721 = vadd.f32 %v720, 1e-05
    %v722 = vrsqrt.pop %v721
    %v723 = vmul.f32 %v619, %v722
    %v724 = vmul.f32 %v715, %v723
    %v725 = vsub.f32 %v620, %v724
    %v726 = vld [vmem:[%s3 + $0x10] sm:$0xff]
    %v727 = vld [vmem:[%s3 + $0x18] sm:$0xff]
    %729 = vset.pattern.permute.xlu0 0
    %730 = vperm.xlu0 %729, %v723
    %v731 = vpop.permute.xlu0 %730
    %v733 = vmul.f32 %v574, %v731
    %v734 = vmul.f32 %v575, %v731
    %v735 = vadd.f32 %v726, %v733
    %v736 = vadd.f32 %v727, %v734
    %738 = vset.pattern.permute.xlu0 0
    %739 = vperm.xlu0 %738, %v725
    %v740 = vpop.permute.xlu0 %739
    %v742 = vadd.f32 %v735, %v740
    %v743 = vadd.f32 %v736, %v740
    %744 = vst [vmem:[%s8 + $0x10] sm:$0xff] %v742
    %745 = vst [vmem:[%s8 + $0x18] sm:$0xff] %v743
    // Predicated region
    $region42: #{covd_forward.3} parent=1 // pred_check
      _
    $region43: #{covd_forward.3} parent=1 // pred_check_branch
      %747 = sbr.rel (0) target = $region45
    $region44: #{covd_forward.3} parent=1 // pred_region
      _
    $region45: #{covd_forward.3} parent=1 // pred_fallthru
      _
    // Predicated region
    $region46: #{covd_forward.3} parent=1 // pred_check
      _
    $region47: #{covd_forward.3} parent=1 // pred_check_branch
      %749 = sbr.rel (0) target = $region49
    $region48: #{covd_forward.3} parent=1 // pred_region
      _
    $region49: #{covd_forward.3} parent=1 // pred_fallthru
      _
    %750 = vsyncpa [#allocation3], 1
    %751 = vsyncpa [#allocation5], 1

</llo_original>
